<compile_context>
chip_gen: v7x
topology: tpu7x:2x2x1
jax: 0.10.0
libtpu: 0.0.40
codegen_flags: <defaults>
</compile_context>

<pallas_src>
import jax
import jax.numpy as jnp
from jax.experimental import pallas as pl
from jax.experimental.pallas import tpu as pltpu


def _mlp_kernel(x_ref, w1_ref, b1_ref, w2_ref, b2_ref, w3_ref, b3_ref, o_ref):
    # MXU matmuls in bf16 with f32 accumulation; epilogue (bias, sigmoid,
    # log_softmax) in f32.
    x = x_ref[...].astype(jnp.bfloat16)

    # fc1 + sigmoid
    h1 = jnp.dot(x, w1_ref[...], preferred_element_type=jnp.float32) + b1_ref[...]
    h1 = jax.nn.sigmoid(h1)

    # fc2 + sigmoid
    h2 = jnp.dot(h1.astype(jnp.bfloat16), w2_ref[...],
                 preferred_element_type=jnp.float32) + b2_ref[...]
    h2 = jax.nn.sigmoid(h2)

    # fc3 + log_softmax (numerically stable, over last axis)
    logits = jnp.dot(h2.astype(jnp.bfloat16), w3_ref[...],
                     preferred_element_type=jnp.float32) + b3_ref[...]
    m = jnp.max(logits, axis=-1, keepdims=True)
    shifted = logits - m
    lse = jnp.log(jnp.sum(jnp.exp(shifted), axis=-1, keepdims=True))
    o_ref[...] = (shifted - lse).astype(o_ref.dtype)


def _round_up(n, m):
    return ((n + m - 1) // m) * m


def img2num_forward(x, params, *, block_batch=2048, vmem_limit_bytes=None):
    """x: [B, 784] float32 (or bfloat16). params: dict of transposed weights/biases.

    block_batch: batch tile size (rows per grid step). Default 2048 fits the
    default scoped VMEM budget on v5e/v6e/v7x; sweep 1024/2048/4096 on real
    hardware (pass vmem_limit_bytes=40<<20 for 4096 on v5e).
    """
    # Weights go to the MXU in bf16; biases stay f32 so the epilogue is f32.
    w1 = params["w1"].astype(jnp.bfloat16)
    w2 = params["w2"].astype(jnp.bfloat16)
    w3 = params["w3"].astype(jnp.bfloat16)
    b1 = params["b1"].astype(jnp.float32)
    b2 = params["b2"].astype(jnp.float32)
    b3 = params["b3"].astype(jnp.float32)

    B, D = x.shape

    # Batch tile: at most block_batch, never (much) more than the batch itself,
    # capped at ceil(B/2) so the grid has >=2 steps (v7x megacore), and always
    # a multiple of 8 for the (8, 128) sublane rule.
    TB = min(block_batch, _round_up(B, 8))
    if B > 8:
        TB = min(TB, _round_up(pl.cdiv(B, 2), 8))
    TB = _round_up(TB, 8)

    grid = (pl.cdiv(B, TB),)  # partial last block is masked by Pallas (no jnp.pad)

    def batch_spec(cols):
        return pl.BlockSpec((TB, cols), lambda i: (i, 0))

    def resident(arr):
        # Constant index_map: whole array stays in VMEM across all grid steps.
        return pl.BlockSpec(arr.shape, lambda i: (0, 0))

    out = pl.pallas_call(
        _mlp_kernel,
        out_shape=jax.ShapeDtypeStruct((B, 10), jnp.float32),
        grid=grid,
        in_specs=[
            batch_spec(D),
            resident(w1), resident(b1),
            resident(w2), resident(b2),
            resident(w3), resident(b3),
        ],
        out_specs=batch_spec(10),
        compiler_params=pltpu.CompilerParams(
            # Batch tiles are independent -> shard across TCs on v7x megacore.
            dimension_semantics=("parallel",),
            vmem_limit_bytes=vmem_limit_bytes,
        ),
    )(x, w1, b1, w2, b2, w3, b3)

    return out


def init_params(key):
    """Deterministic init matching nn.Linear shapes (stored transposed: [in, out])."""
    dims = [(784, 50), (50, 20), (20, 10)]
    params = {}
    for i, (fan_in, fan_out) in enumerate(dims, start=1):
        key, kw, kb = jax.random.split(key, 3)
        bound = 1.0 / jnp.sqrt(fan_in)
        # nn.Linear default init: U(-1/sqrt(fan_in), 1/sqrt(fan_in))
        w = jax.random.uniform(kw, (fan_in, fan_out), jnp.float32, -bound, bound)
        b = jax.random.uniform(kb, (1, fan_out), jnp.float32, -bound, bound)
        params[f"w{i}"] = w
        params[f"b{i}"] = b
    return params


def _reference_forward_f32(x, params):
    h1 = jax.nn.sigmoid(x @ params["w1"] + params["b1"])
    h2 = jax.nn.sigmoid(h1 @ params["w2"] + params["b2"])
    logits = h2 @ params["w3"] + params["b3"]
    return jax.nn.log_softmax(logits, axis=-1)


def _reference_forward_bf16(x, params):
    # Mirrors the kernel's operand casts (bf16 matmuls, f32 accumulation/epilogue).
    def dot(a, w):
        return jnp.dot(a.astype(jnp.bfloat16), w.astype(jnp.bfloat16),
                       preferred_element_type=jnp.float32)
    h1 = jax.nn.sigmoid(dot(x, params["w1"]) + params["b1"])
    h2 = jax.nn.sigmoid(dot(h1, params["w2"]) + params["b2"])
    logits = dot(h2, params["w3"]) + params["b3"]
    return jax.nn.log_softmax(logits, axis=-1)


if __name__ == "__main__":
    key = jax.random.PRNGKey(0)
    key, kx = jax.random.split(key)

    # B=300 is deliberately NOT a multiple of the batch tile so the masked
    # partial-last-block path is exercised; block_batch=128 forces a multi-step
    # pipelined grid even on this tiny example.
    B = 300
    x = jax.random.uniform(kx, (B, 784), jnp.float32)  # MNIST-like, values in [0, 1)
    params = init_params(key)

    out = img2num_forward(x, params, block_batch=128)
    out = jax.block_until_ready(out)

    assert out.shape == (B, 10)
    ref_bf16 = _reference_forward_bf16(x, params)   # same bf16 matmul casts as kernel
    ref_f32 = _reference_forward_f32(x, params)     # pure f32 reference
    assert jnp.allclose(out, ref_bf16, atol=5e-3, rtol=0)
    assert jnp.allclose(out, ref_f32, atol=5e-2, rtol=0)

    print("KERNEL_OK")
</pallas_src>

<mosaic_0001>
module attributes {stable_mosaic.version = 11 : i64} {
  func.func @_mlp_kernel(%arg0: i32, %arg1: memref<128x784xf32, #tpu.memory_space<vmem>>, %arg2: memref<784x50xbf16, #tpu.memory_space<vmem>>, %arg3: memref<1x50xf32, #tpu.memory_space<vmem>>, %arg4: memref<50x20xbf16, #tpu.memory_space<vmem>>, %arg5: memref<1x20xf32, #tpu.memory_space<vmem>>, %arg6: memref<20x10xbf16, #tpu.memory_space<vmem>>, %arg7: memref<1x10xf32, #tpu.memory_space<vmem>>, %arg8: memref<128x10xf32, #tpu.memory_space<vmem>>) attributes {dimension_semantics = [#tpu.dimension_semantics<parallel>], iteration_bounds = array<i64: 3>, scalar_prefetch = 0 : i64, scratch_operands = 0 : i64, tpu.core_type = #tpu.core_type<tc>, window_params = [{transform_indices = @transform_0, window_bounds = array<i64: 128, 784>}, {pipeline_mode = #tpu.pipeline_mode<synchronous>, transform_indices = @transform_1, window_bounds = array<i64: 784, 50>}, {pipeline_mode = #tpu.pipeline_mode<synchronous>, transform_indices = @transform_2, window_bounds = array<i64: 1, 50>}, {pipeline_mode = #tpu.pipeline_mode<synchronous>, transform_indices = @transform_3, window_bounds = array<i64: 50, 20>}, {pipeline_mode = #tpu.pipeline_mode<synchronous>, transform_indices = @transform_4, window_bounds = array<i64: 1, 20>}, {pipeline_mode = #tpu.pipeline_mode<synchronous>, transform_indices = @transform_5, window_bounds = array<i64: 20, 10>}, {pipeline_mode = #tpu.pipeline_mode<synchronous>, transform_indices = @transform_6, window_bounds = array<i64: 1, 10>}, {transform_indices = @transform_7, window_bounds = array<i64: 128, 10>}]} {
    %c0 = arith.constant 0 : index
    %c0_0 = arith.constant 0 : index
    %0 = vector.load %arg1[%c0, %c0_0] : memref<128x784xf32, #tpu.memory_space<vmem>>, vector<128x784xf32>
    %1 = arith.truncf %0 : vector<128x784xf32> to vector<128x784xbf16>
    %c0_1 = arith.constant 0 : index
    %c0_2 = arith.constant 0 : index
    %2 = vector.load %arg2[%c0_1, %c0_2] : memref<784x50xbf16, #tpu.memory_space<vmem>>, vector<784x50xbf16>
    %cst = arith.constant dense<0.000000e+00> : vector<128x50xf32>
    %3 = tpu.matmul %1, %2, %cst {dimension_numbers = #tpu.dot_dimension_numbers<[1], [0], [0], [1], [0, 0, 1, 1], [], []>} : vector<128x784xbf16>, vector<784x50xbf16>, vector<128x50xf32> -> vector<128x50xf32>
    %c0_3 = arith.constant 0 : index
    %c0_4 = arith.constant 0 : index
    %4 = vector.load %arg3[%c0_3, %c0_4] : memref<1x50xf32, #tpu.memory_space<vmem>>, vector<1x50xf32>
    %5 = vector.broadcast %4 : vector<1x50xf32> to vector<128x50xf32>
    %6 = arith.addf %3, %5 : vector<128x50xf32>
    %7 = arith.negf %6 : vector<128x50xf32>
    %8 = math.exp %7 : vector<128x50xf32>
    %cst_5 = arith.constant 1.000000e+00 : f32
    %9 = vector.broadcast %cst_5 : f32 to vector<128x50xf32>
    %10 = arith.addf %9, %8 : vector<128x50xf32>
    %11 = arith.divf %9, %10 : vector<128x50xf32>
    %12 = arith.truncf %11 : vector<128x50xf32> to vector<128x50xbf16>
    %c0_6 = arith.constant 0 : index
    %c0_7 = arith.constant 0 : index
    %13 = vector.load %arg4[%c0_6, %c0_7] : memref<50x20xbf16, #tpu.memory_space<vmem>>, vector<50x20xbf16>
    %cst_8 = arith.constant dense<0.000000e+00> : vector<128x20xf32>
    %14 = tpu.matmul %12, %13, %cst_8 {dimension_numbers = #tpu.dot_dimension_numbers<[1], [0], [0], [1], [0, 0, 1, 1], [], []>} : vector<128x50xbf16>, vector<50x20xbf16>, vector<128x20xf32> -> vector<128x20xf32>
    %c0_9 = arith.constant 0 : index
    %c0_10 = arith.constant 0 : index
    %15 = vector.load %arg5[%c0_9, %c0_10] : memref<1x20xf32, #tpu.memory_space<vmem>>, vector<1x20xf32>
    %16 = vector.broadcast %15 : vector<1x20xf32> to vector<128x20xf32>
    %17 = arith.addf %14, %16 : vector<128x20xf32>
    %18 = arith.negf %17 : vector<128x20xf32>
    %19 = math.exp %18 : vector<128x20xf32>
    %cst_11 = arith.constant 1.000000e+00 : f32
    %20 = vector.broadcast %cst_11 : f32 to vector<128x20xf32>
    %21 = arith.addf %20, %19 : vector<128x20xf32>
    %22 = arith.divf %20, %21 : vector<128x20xf32>
    %23 = arith.truncf %22 : vector<128x20xf32> to vector<128x20xbf16>
    %c0_12 = arith.constant 0 : index
    %c0_13 = arith.constant 0 : index
    %24 = vector.load %arg6[%c0_12, %c0_13] : memref<20x10xbf16, #tpu.memory_space<vmem>>, vector<20x10xbf16>
    %cst_14 = arith.constant dense<0.000000e+00> : vector<128x10xf32>
    %25 = tpu.matmul %23, %24, %cst_14 {dimension_numbers = #tpu.dot_dimension_numbers<[1], [0], [0], [1], [0, 0, 1, 1], [], []>} : vector<128x20xbf16>, vector<20x10xbf16>, vector<128x10xf32> -> vector<128x10xf32>
    %c0_15 = arith.constant 0 : index
    %c0_16 = arith.constant 0 : index
    %26 = vector.load %arg7[%c0_15, %c0_16] : memref<1x10xf32, #tpu.memory_space<vmem>>, vector<1x10xf32>
    %27 = vector.broadcast %26 : vector<1x10xf32> to vector<128x10xf32>
    %28 = arith.addf %25, %27 : vector<128x10xf32>
    %cst_17 = arith.constant dense<0xFF800000> : vector<128xf32>
    %29 = vector.multi_reduction <maximumf>, %28, %cst_17 [1] : vector<128x10xf32> to vector<128xf32>
    %30 = vector.shape_cast %29 : vector<128xf32> to vector<128x1xf32>
    %31 = vector.broadcast %30 : vector<128x1xf32> to vector<128x10xf32>
    %32 = arith.subf %28, %31 : vector<128x10xf32>
    %33 = math.exp %32 : vector<128x10xf32>
    %cst_18 = arith.constant dense<0.000000e+00> : vector<128xf32>
    %34 = vector.multi_reduction <add>, %33, %cst_18 [1] : vector<128x10xf32> to vector<128xf32>
    %35 = vector.shape_cast %34 : vector<128xf32> to vector<128x1xf32>
    %36 = math.log %35 : vector<128x1xf32>
    %37 = vector.broadcast %36 : vector<128x1xf32> to vector<128x10xf32>
    %38 = arith.subf %32, %37 : vector<128x10xf32>
    %c0_19 = arith.constant 0 : index
    %c0_20 = arith.constant 0 : index
    %39 = vector.load %arg8[%c0_19, %c0_20] : memref<128x10xf32, #tpu.memory_space<vmem>>, vector<128x10xf32>
    tpu.vector_store %arg8[%c0_19, %c0_20], %38 {strides = array<i32>} : memref<128x10xf32, #tpu.memory_space<vmem>>, vector<128x10xf32>,
    return
  }
  func.func @transform_0(%arg0: i32) -> (i32, i32) {
    %c0_i32 = arith.constant 0 : i32
    %c0_i32_0 = arith.constant 0 : i32
    return %arg0, %c0_i32 : i32, i32
  }
  func.func @transform_1(%arg0: i32) -> (i32, i32) {
    %c0_i32 = arith.constant 0 : i32
    %c0_i32_0 = arith.constant 0 : i32
    %c0_i32_1 = arith.constant 0 : i32
    return %c0_i32, %c0_i32_0 : i32, i32
  }
  func.func @transform_2(%arg0: i32) -> (i32, i32) {
    %c0_i32 = arith.constant 0 : i32
    %c0_i32_0 = arith.constant 0 : i32
    %c0_i32_1 = arith.constant 0 : i32
    return %c0_i32, %c0_i32_0 : i32, i32
  }
  func.func @transform_3(%arg0: i32) -> (i32, i32) {
    %c0_i32 = arith.constant 0 : i32
    %c0_i32_0 = arith.constant 0 : i32
    %c0_i32_1 = arith.constant 0 : i32
    return %c0_i32, %c0_i32_0 : i32, i32
  }
  func.func @transform_4(%arg0: i32) -> (i32, i32) {
    %c0_i32 = arith.constant 0 : i32
    %c0_i32_0 = arith.constant 0 : i32
    %c0_i32_1 = arith.constant 0 : i32
    return %c0_i32, %c0_i32_0 : i32, i32
  }
  func.func @transform_5(%arg0: i32) -> (i32, i32) {
    %c0_i32 = arith.constant 0 : i32
    %c0_i32_0 = arith.constant 0 : i32
    %c0_i32_1 = arith.constant 0 : i32
    return %c0_i32, %c0_i32_0 : i32, i32
  }
  func.func @transform_6(%arg0: i32) -> (i32, i32) {
    %c0_i32 = arith.constant 0 : i32
    %c0_i32_0 = arith.constant 0 : i32
    %c0_i32_1 = arith.constant 0 : i32
    return %c0_i32, %c0_i32_0 : i32, i32
  }
  func.func @transform_7(%arg0: i32) -> (i32, i32) {
    %c0_i32 = arith.constant 0 : i32
    %c0_i32_0 = arith.constant 0 : i32
    return %arg0, %c0_i32 : i32, i32
  }
}

</mosaic_0001>

<llo_original>
// kernel: tpu_custom_call.1
$region0: #{tpu_custom_call.1}
  #allocation0 [shape = 'u32[]', space=smem, size = 0x4, offset = 0x4, fixed_abs, tag = 'smem constant byte address 0x4 - core index']
  #allocation1 [shape = 'u32[144,128]{1,0:T(1,128)}', space=vmem, size = 0x12000, scoped, tag = 'internal scratch']
  %s0 = inlined_call_operand.hbm [shape: f32[300,784], index: 0, kind: input, shape index: {}]
  %s1 = inlined_call_operand.vmem [shape: bf16[784,50], index: 1, kind: input, shape index: {}]
  %s2 = inlined_call_operand.hbm [shape: f32[1,50], index: 2, kind: input, shape index: {}]
  %s3 = inlined_call_operand.vmem [shape: bf16[50,20], index: 3, kind: input, shape index: {}]
  %s4 = inlined_call_operand.hbm [shape: f32[1,20], index: 4, kind: input, shape index: {}]
  %s5 = inlined_call_operand.vmem [shape: bf16[20,10], index: 5, kind: input, shape index: {}]
  %s6 = inlined_call_operand.hbm [shape: f32[1,10], index: 6, kind: input, shape index: {}]
  %s7 = inlined_call_operand.vmem [shape: f32[300,10], index: 7, kind: output, shape index: {}]
  %s8 = sld [smem:[#allocation0]]
  $region125: #{tpu_custom_call.1} parent=0
    _
  %s10 = ssub.s32 1, %s8
  %s11 = scalar_select 0, %s10, %s8
  $region1: #{tpu_custom_call.1} parent=0
    #allocation2 [shape = 'u8[917504]{0}', space=vmem, size = 0xe0000, scoped, tag = 'input window, operand 0']
    #allocation3 [shape = 's32[2]{0}', space=sflag, size = 0x8, scoped, tag = 'scoped memory for tpu_custom_call.1']
    #allocation4 [shape = 'u8[512]{0}', space=vmem, size = 0x400, scoped, tag = 'input window, operand 2, single buffered']
    #allocation5 [shape = 's32[1]{0}', space=sflag, size = 0x4, scoped, tag = 'scoped memory for tpu_custom_call.1']
    #allocation6 [shape = 'u8[512]{0}', space=vmem, size = 0x400, scoped, tag = 'input window, operand 4, single buffered']
    #allocation7 [shape = 'u8[512]{0}', space=vmem, size = 0x400, scoped, tag = 'input window, operand 6, single buffered']
    #allocation8 [shape = 's32[1]{0}', space=sflag, size = 0x4, scoped, tag = 'scoped memory for tpu_custom_call.1']
    #allocation9 [shape = 'u8[131072]{0}', space=vmem, size = 0x20000, scoped, tag = 'output window, operand 0']
    %12 = vsyncpa [#allocation3], 0
    %s13 = scalar_lea.sflag [#allocation3], 1
    %14 = vsyncpa %s13, 0
    %15 = vsyncpa [#allocation5], 0
    %16 = vsyncpa [#allocation8], 0
    loop: start=0, step=1, limit=5
    $region2: #{tpu_custom_call.1} parent=1 // loop_pre_header
      _
    $region3: #{tpu_custom_call.1} parent=1 // loop_header
      %s18 = sphi 0, %s22
      %p19 = scmp.ge.s32.totalorder %s18, 5
      %s28 = sphi 0, %s30
      %s31 = sphi 0, %s28
      %s32 = sphi 0, %s31
      %s48 = sphi 0, %s32
      %s52 = sphi 0, %s52
      %s54 = sphi 0, %s52
      %s55 = sphi 0, %s54
      %s69 = sphi 0, %s55
      %s73 = sphi 0, %s73
      %s75 = sphi 0, %s73
      %s76 = sphi 0, %s75
      %s90 = sphi 0, %s76
      %s94 = sphi 0, %s94
      %s96 = sphi 0, %s94
      %s97 = sphi 0, %s96
      %s111 = sphi 0, %s97
      %s115 = sphi 0, %s115
      %s117 = sphi 0, %s115
      %s118 = sphi 0, %s117
      %s132 = sphi 0, %s118
      %s136 = sphi 0, %s136
      %s138 = sphi 0, %s136
      %s139 = sphi 0, %s138
      %s153 = sphi 0, %s139
      %s157 = sphi 0, %s157
      %s159 = sphi 0, %s157
      %s160 = sphi 0, %s159
      %s174 = sphi 0, %s160
      %s180 = sphi 0, %s182
      %s183 = sphi 0, %s180
      %s184 = sphi 0, %s183
      %s200 = sphi 0, %s184
    $region4: #{tpu_custom_call.1} parent=1 // loop_header_branch
      %21 = sbr.rel (%p19) target = $region8
    $region5: #{tpu_custom_call.1} parent=1 // loop_body
      %s23 = ssub.s32 %s18, 1
      %s24 = ssub.s32 %s18, 2
      %s25 = sadd.s32 %s18, 1
      %s26 = ssub.s32 %s18, %s25
      %p27 = scmp.eq.s32.totalorder %s26, 0
      %s29 = sadd.s32 %s28, 1
      %s30 = scalar_select %p27, %s28, %s29
      %p33 = pneg %p27
      %p34 = scmp.eq.s32.totalorder %s18, 2
      %p35 = por %p33, %p34
      %p36 = scmp.ne.s32.totalorder %s28, %s31
      %p37 = scmp.eq.s32.totalorder %s18, 0
      %p38 = por %p36, %p37
      %p39 = scmp.ne.s32.totalorder %s28, %s31
      %p40 = scmp.eq.s32.totalorder %s23, 2
      %p41 = por %p39, %p40
      %p42 = scmp.ne.s32.totalorder %s31, %s32
      %p43 = scmp.eq.s32.totalorder %s23, 0
      %p44 = por %p42, %p43
      %p45 = scmp.ne.s32.totalorder %s31, %s32
      %p46 = scmp.eq.s32.totalorder %s24, 2
      %p47 = por %p45, %p46
      %p49 = scmp.ne.s32.totalorder %s32, %s48
      %p50 = scmp.eq.s32.totalorder %s24, 0
      %p51 = por %p49, %p50
      %s53 = sadd.s32 %s52, 1
      %p56 = scmp.eq.s32.totalorder %s18, 2
      %p57 = scmp.ne.s32.totalorder %s52, %s54
      %p58 = scmp.eq.s32.totalorder %s18, 0
      %p59 = por %p57, %p58
      %p60 = scmp.ne.s32.totalorder %s52, %s54
      %p61 = scmp.eq.s32.totalorder %s23, 2
      %p62 = por %p60, %p61
      %p63 = scmp.ne.s32.totalorder %s54, %s55
      %p64 = scmp.eq.s32.totalorder %s23, 0
      %p65 = por %p63, %p64
      %p66 = scmp.ne.s32.totalorder %s54, %s55
      %p67 = scmp.eq.s32.totalorder %s24, 2
      %p68 = por %p66, %p67
      %p70 = scmp.ne.s32.totalorder %s55, %s69
      %p71 = scmp.eq.s32.totalorder %s24, 0
      %p72 = por %p70, %p71
      %s74 = sadd.s32 %s73, 1
      %p77 = scmp.eq.s32.totalorder %s18, 2
      %p78 = scmp.ne.s32.totalorder %s73, %s75
      %p79 = scmp.eq.s32.totalorder %s18, 0
      %p80 = por %p78, %p79
      %p81 = scmp.ne.s32.totalorder %s73, %s75
      %p82 = scmp.eq.s32.totalorder %s23, 2
      %p83 = por %p81, %p82
      %p84 = scmp.ne.s32.totalorder %s75, %s76
      %p85 = scmp.eq.s32.totalorder %s23, 0
      %p86 = por %p84, %p85
      %p87 = scmp.ne.s32.totalorder %s75, %s76
      %p88 = scmp.eq.s32.totalorder %s24, 2
      %p89 = por %p87, %p88
      %p91 = scmp.ne.s32.totalorder %s76, %s90
      %p92 = scmp.eq.s32.totalorder %s24, 0
      %p93 = por %p91, %p92
      %s95 = sadd.s32 %s94, 1
      %p98 = scmp.eq.s32.totalorder %s18, 2
      %p99 = scmp.ne.s32.totalorder %s94, %s96
      %p100 = scmp.eq.s32.totalorder %s18, 0
      %p101 = por %p99, %p100
      %p102 = scmp.ne.s32.totalorder %s94, %s96
      %p103 = scmp.eq.s32.totalorder %s23, 2
      %p104 = por %p102, %p103
      %p105 = scmp.ne.s32.totalorder %s96, %s97
      %p106 = scmp.eq.s32.totalorder %s23, 0
      %p107 = por %p105, %p106
      %p108 = scmp.ne.s32.totalorder %s96, %s97
      %p109 = scmp.eq.s32.totalorder %s24, 2
      %p110 = por %p108, %p109
      %p112 = scmp.ne.s32.totalorder %s97, %s111
      %p113 = scmp.eq.s32.totalorder %s24, 0
      %p114 = por %p112, %p113
      %s116 = sadd.s32 %s115, 1
      %p119 = scmp.eq.s32.totalorder %s18, 2
      %p120 = scmp.ne.s32.totalorder %s115, %s117
      %p121 = scmp.eq.s32.totalorder %s18, 0
      %p122 = por %p120, %p121
      %p123 = scmp.ne.s32.totalorder %s115, %s117
      %p124 = scmp.eq.s32.totalorder %s23, 2
      %p125 = por %p123, %p124
      %p126 = scmp.ne.s32.totalorder %s117, %s118
      %p127 = scmp.eq.s32.totalorder %s23, 0
      %p128 = por %p126, %p127
      %p129 = scmp.ne.s32.totalorder %s117, %s118
      %p130 = scmp.eq.s32.totalorder %s24, 2
      %p131 = por %p129, %p130
      %p133 = scmp.ne.s32.totalorder %s118, %s132
      %p134 = scmp.eq.s32.totalorder %s24, 0
      %p135 = por %p133, %p134
      %s137 = sadd.s32 %s136, 1
      %p140 = scmp.eq.s32.totalorder %s18, 2
      %p141 = scmp.ne.s32.totalorder %s136, %s138
      %p142 = scmp.eq.s32.totalorder %s18, 0
      %p143 = por %p141, %p142
      %p144 = scmp.ne.s32.totalorder %s136, %s138
      %p145 = scmp.eq.s32.totalorder %s23, 2
      %p146 = por %p144, %p145
      %p147 = scmp.ne.s32.totalorder %s138, %s139
      %p148 = scmp.eq.s32.totalorder %s23, 0
      %p149 = por %p147, %p148
      %p150 = scmp.ne.s32.totalorder %s138, %s139
      %p151 = scmp.eq.s32.totalorder %s24, 2
      %p152 = por %p150, %p151
      %p154 = scmp.ne.s32.totalorder %s139, %s153
      %p155 = scmp.eq.s32.totalorder %s24, 0
      %p156 = por %p154, %p155
      %s158 = sadd.s32 %s157, 1
      %p161 = scmp.eq.s32.totalorder %s18, 2
      %p162 = scmp.ne.s32.totalorder %s157, %s159
      %p163 = scmp.eq.s32.totalorder %s18, 0
      %p164 = por %p162, %p163
      %p165 = scmp.ne.s32.totalorder %s157, %s159
      %p166 = scmp.eq.s32.totalorder %s23, 2
      %p167 = por %p165, %p166
      %p168 = scmp.ne.s32.totalorder %s159, %s160
      %p169 = scmp.eq.s32.totalorder %s23, 0
      %p170 = por %p168, %p169
      %p171 = scmp.ne.s32.totalorder %s159, %s160
      %p172 = scmp.eq.s32.totalorder %s24, 2
      %p173 = por %p171, %p172
      %p175 = scmp.ne.s32.totalorder %s160, %s174
      %p176 = scmp.eq.s32.totalorder %s24, 0
      %p177 = por %p175, %p176
      %s178 = ssub.s32 %s18, %s25
      %p179 = scmp.eq.s32.totalorder %s178, 0
      %s181 = sadd.s32 %s180, 1
      %s182 = scalar_select %p179, %s180, %s181
      %p185 = pneg %p179
      %p186 = scmp.eq.s32.totalorder %s18, 2
      %p187 = por %p185, %p186
      %p188 = scmp.ne.s32.totalorder %s180, %s183
      %p189 = scmp.eq.s32.totalorder %s18, 0
      %p190 = por %p188, %p189
      %p191 = scmp.ne.s32.totalorder %s180, %s183
      %p192 = scmp.eq.s32.totalorder %s23, 2
      %p193 = por %p191, %p192
      %p194 = scmp.ne.s32.totalorder %s183, %s184
      %p195 = scmp.eq.s32.totalorder %s23, 0
      %p196 = por %p194, %p195
      %p197 = scmp.ne.s32.totalorder %s183, %s184
      %p198 = scmp.eq.s32.totalorder %s24, 2
      %p199 = por %p197, %p198
      %p201 = scmp.ne.s32.totalorder %s184, %s200
      %p202 = scmp.eq.s32.totalorder %s24, 0
      %p203 = por %p201, %p202
      %p204 = scmp.le.s32.totalorder 1, %s18
      %p205 = scmp.lt.s32.totalorder %s18, 4
      %p206 = pnand %p204, %p205
      %p207 = pneg %p206
      // Predicated region
      $region9: #{tpu_custom_call.1} parent=5 // pred_check
        _
      $region10: #{tpu_custom_call.1} parent=5 // pred_check_branch
        %209 = sbr.rel (%p206) target = $region12
      $region11: #{tpu_custom_call.1} parent=5 // pred_region
        %s210 = ssub.s32 %s18, 1
        // Predicated region
        $region13: #{tpu_custom_call.1} parent=11 // pred_check
          %p211 = pneg %p65
        $region14: #{tpu_custom_call.1} parent=11 // pred_check_branch
          %213 = sbr.rel (%p211) target = $region16
        $region15: #{tpu_custom_call.1} parent=11 // pred_region
          _
        $region16: #{tpu_custom_call.1} parent=11 // pred_fallthru
          _
        // Predicated region
        $region17: #{tpu_custom_call.1} parent=11 // pred_check
          %p214 = pneg %p86
        $region18: #{tpu_custom_call.1} parent=11 // pred_check_branch
          %216 = sbr.rel (%p214) target = $region20
        $region19: #{tpu_custom_call.1} parent=11 // pred_region
          %s218 = ssub.s32 16, 16
          %219 = vsyncadd [#allocation5], %s218
          %s221 = sshll.u32 [#allocation4], 4
          %s222 = int_to_ptr.vmem [resolvable:$true] %s221
          %224 = dma.hbm_to_vmem [thread:$0]  %s2, 16, %s222, [#allocation5]
        $region20: #{tpu_custom_call.1} parent=11 // pred_fallthru
          _
        // Predicated region
        $region21: #{tpu_custom_call.1} parent=11 // pred_check
          %p225 = pneg %p107
        $region22: #{tpu_custom_call.1} parent=11 // pred_check_branch
          %227 = sbr.rel (%p225) target = $region24
        $region23: #{tpu_custom_call.1} parent=11 // pred_region
          _
        $region24: #{tpu_custom_call.1} parent=11 // pred_fallthru
          _
        // Predicated region
        $region25: #{tpu_custom_call.1} parent=11 // pred_check
          %p228 = pneg %p128
        $region26: #{tpu_custom_call.1} parent=11 // pred_check_branch
          %230 = sbr.rel (%p228) target = $region28
        $region27: #{tpu_custom_call.1} parent=11 // pred_region
          %s232 = ssub.s32 16, 16
          %233 = vsyncadd [#allocation5], %s232
          %s235 = sshll.u32 [#allocation6], 4
          %s236 = int_to_ptr.vmem [resolvable:$true] %s235
          %238 = dma.hbm_to_vmem [thread:$0]  %s4, 16, %s236, [#allocation5]
        $region28: #{tpu_custom_call.1} parent=11 // pred_fallthru
          _
        // Predicated region
        $region29: #{tpu_custom_call.1} parent=11 // pred_check
          %p239 = pneg %p149
        $region30: #{tpu_custom_call.1} parent=11 // pred_check_branch
          %241 = sbr.rel (%p239) target = $region32
        $region31: #{tpu_custom_call.1} parent=11 // pred_region
          _
        $region32: #{tpu_custom_call.1} parent=11 // pred_fallthru
          _
        // Predicated region
        $region33: #{tpu_custom_call.1} parent=11 // pred_check
          %p242 = pneg %p170
        $region34: #{tpu_custom_call.1} parent=11 // pred_check_branch
          %244 = sbr.rel (%p242) target = $region36
        $region35: #{tpu_custom_call.1} parent=11 // pred_region
          %s246 = ssub.s32 16, 16
          %247 = vsyncadd [#allocation8], %s246
          %s249 = sshll.u32 [#allocation7], 4
          %s250 = int_to_ptr.vmem [resolvable:$true] %s249
          %252 = dma.hbm_to_vmem [thread:$0]  %s6, 16, %s250, [#allocation8]
        $region36: #{tpu_custom_call.1} parent=11 // pred_fallthru
          _
      $region12: #{tpu_custom_call.1} parent=5 // pred_fallthru
        _
      %p253 = scmp.lt.s32.totalorder %s18, 3
      // Predicated region
      $region37: #{tpu_custom_call.1} parent=5 // pred_check
        %p254 = pneg %p253
      $region38: #{tpu_custom_call.1} parent=5 // pred_check_branch
        %256 = sbr.rel (%p254) target = $region40
      $region39: #{tpu_custom_call.1} parent=5 // pred_region
        // Predicated region
        $region41: #{tpu_custom_call.1} parent=39 // pred_check
          %p257 = pneg %p38
        $region42: #{tpu_custom_call.1} parent=39 // pred_check_branch
          %259 = sbr.rel (%p257) target = $region44
        $region43: #{tpu_custom_call.1} parent=39 // pred_region
          %s260 = sand.u32 %s28, 1
          %s261 = scalar_lea.sflag [#allocation3], %s260
          %s262 = sand.u32 %s28, 1
          %s263 = smul.addr %s262, 896
          %s264 = scalar_lea.vmem [#allocation2], %s263
          %s265 = smul.u32 16, %s18
          %s266 = ssub.s32 38, %s265
          %p267 = scmp.lt.s32.totalorder %s266, 16
          %s268 = scalar_select %p267, %s266, 16
          %s269 = smul.u32 128, %s268
          %s270 = smul.u32 %s269, 7
          %s272 = ssub.s32 14336, %s270
          %273 = vsyncadd %s261, %s272
          %p274 = scmp.ne.s32.totalorder 0, %s270
          %s275 = smul.addr %s265, 7
          %s276 = smul.addr %s275, 128
          %s277 = scalar_lea.hbm %s0, %s276
          %s278 = smul.u32 56, %s268
          %s279 = sshll.u32 %s264, 4
          %s280 = int_to_ptr.vmem [resolvable:$true] %s279
          %s281 = sshll.u32 %s278, 4
          %285 = dma.hbm_to_vmem [thread:$0]  (%p274), %s277, %s281, %s280, %s261, 896, 896, 56
        $region44: #{tpu_custom_call.1} parent=39 // pred_fallthru
          _
      $region40: #{tpu_custom_call.1} parent=5 // pred_fallthru
        _
      %p286 = scmp.le.s32.totalorder 1, %s18
      %p287 = scmp.lt.s32.totalorder %s18, 4
      %p288 = pnand %p286, %p287
      %p289 = pneg %p288
      // Predicated region
      $region45: #{tpu_custom_call.1} parent=5 // pred_check
        _
      $region46: #{tpu_custom_call.1} parent=5 // pred_check_branch
        %291 = sbr.rel (%p288) target = $region48
      $region47: #{tpu_custom_call.1} parent=5 // pred_region
        %s292 = ssub.s32 %s18, 1
        %s293 = sand.u32 %s31, 1
        %s294 = scalar_lea.sflag [#allocation3], %s293
        %s295 = sand.u32 %s31, 1
        %s296 = smul.addr %s295, 896
        %s297 = scalar_lea.vmem [#allocation2], %s296
        // Predicated region
        $region49: #{tpu_custom_call.1} parent=47 // pred_check
          %p298 = pneg %p44
        $region50: #{tpu_custom_call.1} parent=47 // pred_check_branch
          %300 = sbr.rel (%p298) target = $region52
        $region51: #{tpu_custom_call.1} parent=47 // pred_region
          %301 = dma.done %s294, 14336
        $region52: #{tpu_custom_call.1} parent=47 // pred_fallthru
          _
        // Predicated region
        $region53: #{tpu_custom_call.1} parent=47 // pred_check
          %p302 = pneg %p86
        $region54: #{tpu_custom_call.1} parent=47 // pred_check_branch
          %304 = sbr.rel (%p302) target = $region56
        $region55: #{tpu_custom_call.1} parent=47 // pred_region
          %305 = dma.done [#allocation5], 16
        $region56: #{tpu_custom_call.1} parent=47 // pred_fallthru
          _
        // Predicated region
        $region57: #{tpu_custom_call.1} parent=47 // pred_check
          %p306 = pneg %p128
        $region58: #{tpu_custom_call.1} parent=47 // pred_check_branch
          %308 = sbr.rel (%p306) target = $region60
        $region59: #{tpu_custom_call.1} parent=47 // pred_region
          %309 = dma.done [#allocation5], 16
        $region60: #{tpu_custom_call.1} parent=47 // pred_fallthru
          _
        // Predicated region
        $region61: #{tpu_custom_call.1} parent=47 // pred_check
          %p310 = pneg %p170
        $region62: #{tpu_custom_call.1} parent=47 // pred_check_branch
          %312 = sbr.rel (%p310) target = $region64
        $region63: #{tpu_custom_call.1} parent=47 // pred_region
          %313 = dma.done [#allocation8], 16
        $region64: #{tpu_custom_call.1} parent=47 // pred_fallthru
          _
        %s314 = sand.u32 %s31, 1
        %s315 = scalar_lea.sflag [#allocation3], %s314
        %s316 = sand.u32 %s31, 1
        %s317 = smul.addr %s316, 896
        %s318 = scalar_lea.vmem [#allocation2], %s317
        %p319 = pneg %p44
        %p320 = pneg %p41
        %p321 = pneg %p65
        %p322 = pneg %p62
        %p323 = pneg %p86
        %p324 = pneg %p83
        %p325 = pneg %p107
        %p326 = pneg %p104
        %p327 = pneg %p128
        %p328 = pneg %p125
        %p329 = pneg %p149
        %p330 = pneg %p146
        %p331 = pneg %p170
        %p332 = pneg %p167
        %p333 = pneg %p196
        %p334 = pneg %p193
        %s335 = sand.u32 %s183, 1
        %s336 = sand.u32 %s183, 1
        %s337 = smul.addr %s336, 128
        %s338 = scalar_lea.vmem [#allocation9], %s337
        %s339 = smul.u32 16, %s23
        %s340 = ssub.s32 38, %s339
        %p341 = scmp.lt.s32.totalorder %s340, 16
        %s342 = scalar_select %p341, %s340, 16
        %s343 = smul.u32 128, %s342
        %s344 = smul.u32 %s343, 7
        %s345 = smul.u32 16, %s23
        %s346 = ssub.s32 38, %s345
        %p347 = scmp.lt.s32.totalorder %s346, 16
        %s348 = scalar_select %p347, %s346, 16
        %s349 = smul.u32 128, %s348
        %v351 = vld [vmem:[%s297] sm:$0xff]
        %v352 = vld [vmem:[%s297 + $0x8] sm:$0xff]
        %v353 = vld [vmem:[%s297 + $0x10] sm:$0xff]
        %v354 = vld [vmem:[%s297 + $0x18] sm:$0xff]
        %v355 = vld [vmem:[%s297 + $0x20] sm:$0xff]
        %v356 = vld [vmem:[%s297 + $0x28] sm:$0xff]
        %v357 = vld [vmem:[%s297 + $0x30] sm:$0xff]
        %v358 = vld [vmem:[%s297 + $0x38] sm:$0xff]
        %v359 = vld [vmem:[%s297 + $0x40] sm:$0xff]
        %v360 = vld [vmem:[%s297 + $0x48] sm:$0xff]
        %v361 = vld [vmem:[%s297 + $0x50] sm:$0xff]
        %v362 = vld [vmem:[%s297 + $0x58] sm:$0xff]
        %v363 = vld [vmem:[%s297 + $0x60] sm:$0xff]
        %v364 = vld [vmem:[%s297 + $0x68] sm:$0xff]
        %v365 = vld [vmem:[%s297 + $0x70] sm:$0xff]
        %v366 = vld [vmem:[%s297 + $0x78] sm:$0xff]
        %v367 = vld [vmem:[%s297 + $0x80] sm:$0xff]
        %v368 = vld [vmem:[%s297 + $0x88] sm:$0xff]
        %v369 = vld [vmem:[%s297 + $0x90] sm:$0xff]
        %v370 = vld [vmem:[%s297 + $0x98] sm:$0xff]
        %v371 = vld [vmem:[%s297 + $0xa0] sm:$0xff]
        %v372 = vld [vmem:[%s297 + $0xa8] sm:$0xff]
        %v373 = vld [vmem:[%s297 + $0xb0] sm:$0xff]
        %v374 = vld [vmem:[%s297 + $0xb8] sm:$0xff]
        %v375 = vld [vmem:[%s297 + $0xc0] sm:$0xff]
        %v376 = vld [vmem:[%s297 + $0xc8] sm:$0xff]
        %v377 = vld [vmem:[%s297 + $0xd0] sm:$0xff]
        %v378 = vld [vmem:[%s297 + $0xd8] sm:$0xff]
        %v379 = vld [vmem:[%s297 + $0xe0] sm:$0xff]
        %v380 = vld [vmem:[%s297 + $0xe8] sm:$0xff]
        %v381 = vld [vmem:[%s297 + $0xf0] sm:$0xff]
        %v382 = vld [vmem:[%s297 + $0xf8] sm:$0xff]
        %v383 = vld [vmem:[%s297 + $0x100] sm:$0xff]
        %v384 = vld [vmem:[%s297 + $0x108] sm:$0xff]
        %v385 = vld [vmem:[%s297 + $0x110] sm:$0xff]
        %v386 = vld [vmem:[%s297 + $0x118] sm:$0xff]
        %v387 = vld [vmem:[%s297 + $0x120] sm:$0xff]
        %v388 = vld [vmem:[%s297 + $0x128] sm:$0xff]
        %v389 = vld [vmem:[%s297 + $0x130] sm:$0xff]
        %v390 = vld [vmem:[%s297 + $0x138] sm:$0xff]
        %v391 = vld [vmem:[%s297 + $0x140] sm:$0xff]
        %v392 = vld [vmem:[%s297 + $0x148] sm:$0xff]
        %v393 = vld [vmem:[%s297 + $0x150] sm:$0xff]
        %v394 = vld [vmem:[%s297 + $0x158] sm:$0xff]
        %v395 = vld [vmem:[%s297 + $0x160] sm:$0xff]
        %v396 = vld [vmem:[%s297 + $0x168] sm:$0xff]
        %v397 = vld [vmem:[%s297 + $0x170] sm:$0xff]
        %v398 = vld [vmem:[%s297 + $0x178] sm:$0xff]
        %v399 = vld [vmem:[%s297 + $0x180] sm:$0xff]
        %v400 = vld [vmem:[%s297 + $0x188] sm:$0xff]
        %v401 = vld [vmem:[%s297 + $0x190] sm:$0xff]
        %v402 = vld [vmem:[%s297 + $0x198] sm:$0xff]
        %v403 = vld [vmem:[%s297 + $0x1a0] sm:$0xff]
        %v404 = vld [vmem:[%s297 + $0x1a8] sm:$0xff]
        %v405 = vld [vmem:[%s297 + $0x1b0] sm:$0xff]
        %v406 = vld [vmem:[%s297 + $0x1b8] sm:$0xff]
        %v407 = vld [vmem:[%s297 + $0x1c0] sm:$0xff]
        %v408 = vld [vmem:[%s297 + $0x1c8] sm:$0xff]
        %v409 = vld [vmem:[%s297 + $0x1d0] sm:$0xff]
        %v410 = vld [vmem:[%s297 + $0x1d8] sm:$0xff]
        %v411 = vld [vmem:[%s297 + $0x1e0] sm:$0xff]
        %v412 = vld [vmem:[%s297 + $0x1e8] sm:$0xff]
        %v413 = vld [vmem:[%s297 + $0x1f0] sm:$0xff]
        %v414 = vld [vmem:[%s297 + $0x1f8] sm:$0xff]
        %v415 = vld [vmem:[%s297 + $0x200] sm:$0xff]
        %v416 = vld [vmem:[%s297 + $0x208] sm:$0xff]
        %v417 = vld [vmem:[%s297 + $0x210] sm:$0xff]
        %v418 = vld [vmem:[%s297 + $0x218] sm:$0xff]
        %v419 = vld [vmem:[%s297 + $0x220] sm:$0xff]
        %v420 = vld [vmem:[%s297 + $0x228] sm:$0xff]
        %v421 = vld [vmem:[%s297 + $0x230] sm:$0xff]
        %v422 = vld [vmem:[%s297 + $0x238] sm:$0xff]
        %v423 = vld [vmem:[%s297 + $0x240] sm:$0xff]
        %v424 = vld [vmem:[%s297 + $0x248] sm:$0xff]
        %v425 = vld [vmem:[%s297 + $0x250] sm:$0xff]
        %v426 = vld [vmem:[%s297 + $0x258] sm:$0xff]
        %v427 = vld [vmem:[%s297 + $0x260] sm:$0xff]
        %v428 = vld [vmem:[%s297 + $0x268] sm:$0xff]
        %v429 = vld [vmem:[%s297 + $0x270] sm:$0xff]
        %v430 = vld [vmem:[%s297 + $0x278] sm:$0xff]
        %v431 = vld [vmem:[%s297 + $0x280] sm:$0xff]
        %v432 = vld [vmem:[%s297 + $0x288] sm:$0xff]
        %v433 = vld [vmem:[%s297 + $0x290] sm:$0xff]
        %v434 = vld [vmem:[%s297 + $0x298] sm:$0xff]
        %v435 = vld [vmem:[%s297 + $0x2a0] sm:$0xff]
        %v436 = vld [vmem:[%s297 + $0x2a8] sm:$0xff]
        %v437 = vld [vmem:[%s297 + $0x2b0] sm:$0xff]
        %v438 = vld [vmem:[%s297 + $0x2b8] sm:$0xff]
        %v439 = vld [vmem:[%s297 + $0x2c0] sm:$0xff]
        %v440 = vld [vmem:[%s297 + $0x2c8] sm:$0xff]
        %v441 = vld [vmem:[%s297 + $0x2d0] sm:$0xff]
        %v442 = vld [vmem:[%s297 + $0x2d8] sm:$0xff]
        %v443 = vld [vmem:[%s297 + $0x2e0] sm:$0xff]
        %v444 = vld [vmem:[%s297 + $0x2e8] sm:$0xff]
        %v445 = vld [vmem:[%s297 + $0x2f0] sm:$0xff]
        %v446 = vld [vmem:[%s297 + $0x2f8] sm:$0xff]
        %v447 = vld [vmem:[%s297 + $0x300] sm:$0xff]
        %v448 = vld [vmem:[%s297 + $0x308] sm:$0xff]
        %v449 = vld [vmem:[%s297 + $0x310] sm:$0xff]
        %v450 = vld [vmem:[%s297 + $0x318] sm:$0xff]
        %v451 = vld [vmem:[%s297 + $0x320] sm:$0xff]
        %v452 = vld [vmem:[%s297 + $0x328] sm:$0xff]
        %v453 = vld [vmem:[%s297 + $0x330] sm:$0xff]
        %v454 = vld [vmem:[%s297 + $0x338] sm:$0xff]
        %v455 = vld [vmem:[%s297 + $0x340] sm:$0xff]
        %v456 = vld [vmem:[%s297 + $0x348] sm:$0xff]
        %v457 = vld [vmem:[%s297 + $0x350] sm:$0xff]
        %v458 = vld [vmem:[%s297 + $0x358] sm:$0xff]
        %v459 = vld [vmem:[%s297 + $0x360] sm:$0xff]
        %v460 = vld [vmem:[%s297 + $0x368] sm:$0xff]
        %v461 = vld [vmem:[%s297 + $0x370] sm:$0xff]
        %v462 = vld [vmem:[%s297 + $0x378] sm:$0xff]
        %v463 = vpack.c.bf16 %v358, %v351
        %v464 = vpack.c.bf16 %v359, %v352
        %v465 = vpack.c.bf16 %v360, %v353
        %v466 = vpack.c.bf16 %v361, %v354
        %v467 = vpack.c.bf16 %v362, %v355
        %v468 = vpack.c.bf16 %v363, %v356
        %v469 = vpack.c.bf16 %v364, %v357
        %v470 = vpack.c.bf16 %v372, %v365
        %v471 = vpack.c.bf16 %v373, %v366
        %v472 = vpack.c.bf16 %v374, %v367
        %v473 = vpack.c.bf16 %v375, %v368
        %v474 = vpack.c.bf16 %v376, %v369
        %v475 = vpack.c.bf16 %v377, %v370
        %v476 = vpack.c.bf16 %v378, %v371
        %v477 = vpack.c.bf16 %v386, %v379
        %v478 = vpack.c.bf16 %v387, %v380
        %v479 = vpack.c.bf16 %v388, %v381
        %v480 = vpack.c.bf16 %v389, %v382
        %v481 = vpack.c.bf16 %v390, %v383
        %v482 = vpack.c.bf16 %v391, %v384
        %v483 = vpack.c.bf16 %v392, %v385
        %v484 = vpack.c.bf16 %v400, %v393
        %v485 = vpack.c.bf16 %v401, %v394
        %v486 = vpack.c.bf16 %v402, %v395
        %v487 = vpack.c.bf16 %v403, %v396
        %v488 = vpack.c.bf16 %v404, %v397
        %v489 = vpack.c.bf16 %v405, %v398
        %v490 = vpack.c.bf16 %v406, %v399
        %v491 = vpack.c.bf16 %v414, %v407
        %v492 = vpack.c.bf16 %v415, %v408
        %v493 = vpack.c.bf16 %v416, %v409
        %v494 = vpack.c.bf16 %v417, %v410
        %v495 = vpack.c.bf16 %v418, %v411
        %v496 = vpack.c.bf16 %v419, %v412
        %v497 = vpack.c.bf16 %v420, %v413
        %v498 = vpack.c.bf16 %v428, %v421
        %v499 = vpack.c.bf16 %v429, %v422
        %v500 = vpack.c.bf16 %v430, %v423
        %v501 = vpack.c.bf16 %v431, %v424
        %v502 = vpack.c.bf16 %v432, %v425
        %v503 = vpack.c.bf16 %v433, %v426
        %v504 = vpack.c.bf16 %v434, %v427
        %v505 = vpack.c.bf16 %v442, %v435
        %v506 = vpack.c.bf16 %v443, %v436
        %v507 = vpack.c.bf16 %v444, %v437
        %v508 = vpack.c.bf16 %v445, %v438
        %v509 = vpack.c.bf16 %v446, %v439
        %v510 = vpack.c.bf16 %v447, %v440
        %v511 = vpack.c.bf16 %v448, %v441
        %v512 = vpack.c.bf16 %v456, %v449
        %v513 = vpack.c.bf16 %v457, %v450
        %v514 = vpack.c.bf16 %v458, %v451
        %v515 = vpack.c.bf16 %v459, %v452
        %v516 = vpack.c.bf16 %v460, %v453
        %v517 = vpack.c.bf16 %v461, %v454
        %v518 = vpack.c.bf16 %v462, %v455
        %v519 = vld [vmem:[%s1] sm:$0xf]
        %v520 = vld [vmem:[%s1 + $0x4] sm:$0xf]
        %v521 = vld [vmem:[%s1 + $0x8] sm:$0xf]
        %v522 = vld [vmem:[%s1 + $0xc] sm:$0xf]
        %v523 = vld [vmem:[%s1 + $0x10] sm:$0xf]
        %v524 = vld [vmem:[%s1 + $0x14] sm:$0xf]
        %v525 = vld [vmem:[%s1 + $0x18] sm:$0xf]
        %v526 = vld [vmem:[%s1 + $0x1c] sm:$0xf]
        %v527 = vld [vmem:[%s1 + $0x20] sm:$0xf]
        %v528 = vld [vmem:[%s1 + $0x24] sm:$0xf]
        %v529 = vld [vmem:[%s1 + $0x28] sm:$0xf]
        %v530 = vld [vmem:[%s1 + $0x2c] sm:$0xf]
        %v531 = vld [vmem:[%s1 + $0x30] sm:$0xf]
        %v532 = vld [vmem:[%s1 + $0x34] sm:$0xf]
        %v533 = vld [vmem:[%s1 + $0x38] sm:$0xf]
        %v534 = vld [vmem:[%s1 + $0x3c] sm:$0xf]
        %v535 = vld [vmem:[%s1 + $0x40] sm:$0xf]
        %v536 = vld [vmem:[%s1 + $0x44] sm:$0xf]
        %v537 = vld [vmem:[%s1 + $0x48] sm:$0xf]
        %v538 = vld [vmem:[%s1 + $0x4c] sm:$0xf]
        %v539 = vld [vmem:[%s1 + $0x50] sm:$0xf]
        %v540 = vld [vmem:[%s1 + $0x54] sm:$0xf]
        %v541 = vld [vmem:[%s1 + $0x58] sm:$0xf]
        %v542 = vld [vmem:[%s1 + $0x5c] sm:$0xf]
        %v543 = vld [vmem:[%s1 + $0x60] sm:$0xf]
        %v544 = vld [vmem:[%s1 + $0x64] sm:$0xf]
        %v545 = vld [vmem:[%s1 + $0x68] sm:$0xf]
        %v546 = vld [vmem:[%s1 + $0x6c] sm:$0xf]
        %v547 = vld [vmem:[%s1 + $0x70] sm:$0xf]
        %v548 = vld [vmem:[%s1 + $0x74] sm:$0xf]
        %v549 = vld [vmem:[%s1 + $0x78] sm:$0xf]
        %v550 = vld [vmem:[%s1 + $0x7c] sm:$0xf]
        %v551 = vld [vmem:[%s1 + $0x80] sm:$0xf]
        %v552 = vld [vmem:[%s1 + $0x84] sm:$0xf]
        %v553 = vld [vmem:[%s1 + $0x88] sm:$0xf]
        %v554 = vld [vmem:[%s1 + $0x8c] sm:$0xf]
        %v555 = vld [vmem:[%s1 + $0x90] sm:$0xf]
        %v556 = vld [vmem:[%s1 + $0x94] sm:$0xf]
        %v557 = vld [vmem:[%s1 + $0x98] sm:$0xf]
        %v558 = vld [vmem:[%s1 + $0x9c] sm:$0xf]
        %v559 = vld [vmem:[%s1 + $0xa0] sm:$0xf]
        %v560 = vld [vmem:[%s1 + $0xa4] sm:$0xf]
        %v561 = vld [vmem:[%s1 + $0xa8] sm:$0xf]
        %v562 = vld [vmem:[%s1 + $0xac] sm:$0xf]
        %v563 = vld [vmem:[%s1 + $0xb0] sm:$0xf]
        %v564 = vld [vmem:[%s1 + $0xb4] sm:$0xf]
        %v565 = vld [vmem:[%s1 + $0xb8] sm:$0xf]
        %v566 = vld [vmem:[%s1 + $0xbc] sm:$0xf]
        %v567 = vld [vmem:[%s1 + $0xc0] sm:$0xf]
        %v568 = vld [vmem:[%s1 + $0xc4] sm:$0xf]
        %v569 = vld [vmem:[%s1 + $0xc8] sm:$0xf]
        %v570 = vld [vmem:[%s1 + $0xcc] sm:$0xf]
        %v571 = vld [vmem:[%s1 + $0xd0] sm:$0xf]
        %v572 = vld [vmem:[%s1 + $0xd4] sm:$0xf]
        %v573 = vld [vmem:[%s1 + $0xd8] sm:$0xf]
        %v574 = vld [vmem:[%s1 + $0xdc] sm:$0xf]
        %v575 = vld [vmem:[%s1 + $0xe0] sm:$0xf]
        %v576 = vld [vmem:[%s1 + $0xe4] sm:$0xf]
        %v577 = vld [vmem:[%s1 + $0xe8] sm:$0xf]
        %v578 = vld [vmem:[%s1 + $0xec] sm:$0xf]
        %v579 = vld [vmem:[%s1 + $0xf0] sm:$0xf]
        %v580 = vld [vmem:[%s1 + $0xf4] sm:$0xf]
        %v581 = vld [vmem:[%s1 + $0xf8] sm:$0xf]
        %v582 = vld [vmem:[%s1 + $0xfc] sm:$0xf]
        %v583 = vld [vmem:[%s1 + $0x100] sm:$0xf]
        %v584 = vld [vmem:[%s1 + $0x104] sm:$0xf]
        %v585 = vld [vmem:[%s1 + $0x108] sm:$0xf]
        %v586 = vld [vmem:[%s1 + $0x10c] sm:$0xf]
        %v587 = vld [vmem:[%s1 + $0x110] sm:$0xf]
        %v588 = vld [vmem:[%s1 + $0x114] sm:$0xf]
        %v589 = vld [vmem:[%s1 + $0x118] sm:$0xf]
        %v590 = vld [vmem:[%s1 + $0x11c] sm:$0xf]
        %v591 = vld [vmem:[%s1 + $0x120] sm:$0xf]
        %v592 = vld [vmem:[%s1 + $0x124] sm:$0xf]
        %v593 = vld [vmem:[%s1 + $0x128] sm:$0xf]
        %v594 = vld [vmem:[%s1 + $0x12c] sm:$0xf]
        %v595 = vld [vmem:[%s1 + $0x130] sm:$0xf]
        %v596 = vld [vmem:[%s1 + $0x134] sm:$0xf]
        %v597 = vld [vmem:[%s1 + $0x138] sm:$0xf]
        %v598 = vld [vmem:[%s1 + $0x13c] sm:$0xf]
        %v599 = vld [vmem:[%s1 + $0x140] sm:$0xf]
        %v600 = vld [vmem:[%s1 + $0x144] sm:$0xf]
        %v601 = vld [vmem:[%s1 + $0x148] sm:$0xf]
        %v602 = vld [vmem:[%s1 + $0x14c] sm:$0xf]
        %v603 = vld [vmem:[%s1 + $0x150] sm:$0xf]
        %v604 = vld [vmem:[%s1 + $0x154] sm:$0xf]
        %v605 = vld [vmem:[%s1 + $0x158] sm:$0xf]
        %v606 = vld [vmem:[%s1 + $0x15c] sm:$0xf]
        %v607 = vld [vmem:[%s1 + $0x160] sm:$0xf]
        %v608 = vld [vmem:[%s1 + $0x164] sm:$0xf]
        %v609 = vld [vmem:[%s1 + $0x168] sm:$0xf]
        %v610 = vld [vmem:[%s1 + $0x16c] sm:$0xf]
        %v611 = vld [vmem:[%s1 + $0x170] sm:$0xf]
        %v612 = vld [vmem:[%s1 + $0x174] sm:$0xf]
        %v613 = vld [vmem:[%s1 + $0x178] sm:$0xf]
        %v614 = vld [vmem:[%s1 + $0x17c] sm:$0xf]
        %v615 = vld [vmem:[%s1 + $0x180] sm:$0xf]
        %v616 = vld [vmem:[%s1 + $0x184] sm:$0xf]
        %v617 = vld [vmem:[#allocation4] sm:$0x1]
        %v619 = vlaneseq
        %v620 = vshrl.u32 %v619, 7
        %v621 = vsub.s32 0, %v620
        %v622 = vrot.slane %v617, %v621
        %v722 = vunpack.c.l.b16 %v519
        %v723 = vunpack.c.l.b16 %v520
        %v724 = vunpack.c.l.b16 %v521
        %v725 = vunpack.c.l.b16 %v522
        %v726 = vunpack.c.l.b16 %v523
        %v727 = vunpack.c.l.b16 %v524
        %v728 = vunpack.c.l.b16 %v525
        %v729 = vunpack.c.l.b16 %v526
        %v730 = vunpack.c.l.b16 %v527
        %v731 = vunpack.c.l.b16 %v528
        %v732 = vunpack.c.l.b16 %v529
        %v733 = vunpack.c.l.b16 %v530
        %v734 = vunpack.c.l.b16 %v531
        %v735 = vunpack.c.l.b16 %v532
        %v736 = vunpack.c.l.b16 %v533
        %v737 = vunpack.c.l.b16 %v534
        %v738 = vunpack.c.l.b16 %v535
        %v739 = vunpack.c.l.b16 %v536
        %v740 = vunpack.c.l.b16 %v537
        %v741 = vunpack.c.l.b16 %v538
        %v742 = vunpack.c.l.b16 %v539
        %v743 = vunpack.c.l.b16 %v540
        %v744 = vunpack.c.l.b16 %v541
        %v745 = vunpack.c.l.b16 %v542
        %v746 = vunpack.c.l.b16 %v543
        %v747 = vunpack.c.l.b16 %v544
        %v748 = vunpack.c.l.b16 %v545
        %v749 = vunpack.c.l.b16 %v546
        %v750 = vunpack.c.l.b16 %v547
        %v751 = vunpack.c.l.b16 %v548
        %v752 = vunpack.c.l.b16 %v549
        %v753 = vunpack.c.l.b16 %v550
        %v754 = vunpack.c.l.b16 %v551
        %v755 = vunpack.c.l.b16 %v552
        %v756 = vunpack.c.l.b16 %v553
        %v757 = vunpack.c.l.b16 %v554
        %v758 = vunpack.c.l.b16 %v555
        %v759 = vunpack.c.l.b16 %v556
        %v760 = vunpack.c.l.b16 %v557
        %v761 = vunpack.c.l.b16 %v558
        %v762 = vunpack.c.l.b16 %v559
        %v763 = vunpack.c.l.b16 %v560
        %v764 = vunpack.c.l.b16 %v561
        %v765 = vunpack.c.l.b16 %v562
        %v766 = vunpack.c.l.b16 %v563
        %v767 = vunpack.c.l.b16 %v564
        %v768 = vunpack.c.l.b16 %v565
        %v769 = vunpack.c.l.b16 %v566
        %v770 = vunpack.c.l.b16 %v567
        %v771 = vunpack.c.l.b16 %v568
        %v772 = vunpack.c.l.b16 %v569
        %v773 = vunpack.c.l.b16 %v570
        %v774 = vunpack.c.l.b16 %v571
        %v775 = vunpack.c.l.b16 %v572
        %v776 = vunpack.c.l.b16 %v573
        %v777 = vunpack.c.l.b16 %v574
        %v778 = vunpack.c.l.b16 %v575
        %v779 = vunpack.c.l.b16 %v576
        %v780 = vunpack.c.l.b16 %v577
        %v781 = vunpack.c.l.b16 %v578
        %v782 = vunpack.c.l.b16 %v579
        %v783 = vunpack.c.l.b16 %v580
        %v784 = vunpack.c.l.b16 %v581
        %v785 = vunpack.c.l.b16 %v582
        %v786 = vunpack.c.l.b16 %v583
        %v787 = vunpack.c.l.b16 %v584
        %v788 = vunpack.c.l.b16 %v585
        %v789 = vunpack.c.l.b16 %v586
        %v790 = vunpack.c.l.b16 %v587
        %v791 = vunpack.c.l.b16 %v588
        %v792 = vunpack.c.l.b16 %v589
        %v793 = vunpack.c.l.b16 %v590
        %v794 = vunpack.c.l.b16 %v591
        %v795 = vunpack.c.l.b16 %v592
        %v796 = vunpack.c.l.b16 %v593
        %v797 = vunpack.c.l.b16 %v594
        %v798 = vunpack.c.l.b16 %v595
        %v799 = vunpack.c.l.b16 %v596
        %v800 = vunpack.c.l.b16 %v597
        %v801 = vunpack.c.l.b16 %v598
        %v802 = vunpack.c.l.b16 %v599
        %v803 = vunpack.c.l.b16 %v600
        %v804 = vunpack.c.l.b16 %v601
        %v805 = vunpack.c.l.b16 %v602
        %v806 = vunpack.c.l.b16 %v603
        %v807 = vunpack.c.l.b16 %v604
        %v808 = vunpack.c.l.b16 %v605
        %v809 = vunpack.c.l.b16 %v606
        %v810 = vunpack.c.l.b16 %v607
        %v811 = vunpack.c.l.b16 %v608
        %v812 = vunpack.c.l.b16 %v609
        %v813 = vunpack.c.l.b16 %v610
        %v814 = vunpack.c.l.b16 %v611
        %v815 = vunpack.c.l.b16 %v612
        %v816 = vunpack.c.l.b16 %v613
        %v817 = vunpack.c.l.b16 %v614
        %v818 = vunpack.c.l.b16 %v615
        %v819 = vunpack.c.l.b16 %v616
        %v820 = vpack.c.b16 %v723, %v722
        %v821 = vpack.c.b16 %v725, %v724
        %v822 = vpack.c.b16 %v727, %v726
        %v823 = vpack.c.b16 %v729, %v728
        %v824 = vpack.c.b16 %v731, %v730
        %v825 = vpack.c.b16 %v733, %v732
        %v826 = vpack.c.b16 %v735, %v734
        %v827 = vpack.c.b16 %v737, %v736
        %v828 = vpack.c.b16 %v739, %v738
        %v829 = vpack.c.b16 %v741, %v740
        %v830 = vpack.c.b16 %v743, %v742
        %v831 = vpack.c.b16 %v745, %v744
        %v832 = vpack.c.b16 %v747, %v746
        %v833 = vpack.c.b16 %v749, %v748
        %v834 = vpack.c.b16 %v751, %v750
        %v835 = vpack.c.b16 %v753, %v752
        %v836 = vpack.c.b16 %v755, %v754
        %v837 = vpack.c.b16 %v757, %v756
        %v838 = vpack.c.b16 %v759, %v758
        %v839 = vpack.c.b16 %v761, %v760
        %v840 = vpack.c.b16 %v763, %v762
        %v841 = vpack.c.b16 %v765, %v764
        %v842 = vpack.c.b16 %v767, %v766
        %v843 = vpack.c.b16 %v769, %v768
        %v844 = vpack.c.b16 %v771, %v770
        %v845 = vpack.c.b16 %v773, %v772
        %v846 = vpack.c.b16 %v775, %v774
        %v847 = vpack.c.b16 %v777, %v776
        %v848 = vpack.c.b16 %v779, %v778
        %v849 = vpack.c.b16 %v781, %v780
        %v850 = vpack.c.b16 %v783, %v782
        %v851 = vpack.c.b16 %v785, %v784
        %v852 = vpack.c.b16 %v787, %v786
        %v853 = vpack.c.b16 %v789, %v788
        %v854 = vpack.c.b16 %v791, %v790
        %v855 = vpack.c.b16 %v793, %v792
        %v856 = vpack.c.b16 %v795, %v794
        %v857 = vpack.c.b16 %v797, %v796
        %v858 = vpack.c.b16 %v799, %v798
        %v859 = vpack.c.b16 %v801, %v800
        %v860 = vpack.c.b16 %v803, %v802
        %v861 = vpack.c.b16 %v805, %v804
        %v862 = vpack.c.b16 %v807, %v806
        %v863 = vpack.c.b16 %v809, %v808
        %v864 = vpack.c.b16 %v811, %v810
        %v865 = vpack.c.b16 %v813, %v812
        %v866 = vpack.c.b16 %v815, %v814
        %v867 = vpack.c.b16 %v817, %v816
        %v868 = vpack.c.b16 %v819, %v818
        %vm918 = vcmask 130048
        %v920 = vsel %vm918, %v469, 0
        %v923 = vsel %vm918, %v476, 0
        %v926 = vsel %vm918, %v483, 0
        %v929 = vsel %vm918, %v490, 0
        %v932 = vsel %vm918, %v497, 0
        %v935 = vsel %vm918, %v504, 0
        %v938 = vsel %vm918, %v511, 0
        %v941 = vsel %vm918, %v518, 0
        %943 = vmatprep.subr.bf16.mxu0 0
        %944 = vmatpush1.bf16.msra.mxu0 %v820
        %945 = vmatprep.subr.bf16.mxu0 0
        %946 = vmatpush1.bf16.msra.mxu0 %v821
        %947 = vmatprep.subr.bf16.mxu0 0
        %948 = vmatpush1.bf16.msra.mxu0 %v822
        %949 = vmatprep.subr.bf16.mxu0 0
        %950 = vmatpush1.bf16.msra.mxu0 %v823
        %951 = vmatprep.subr.bf16.mxu0 0
        %952 = vmatpush1.bf16.msra.mxu0 %v824
        %953 = vmatprep.subr.bf16.mxu0 0
        %954 = vmatpush1.bf16.msra.mxu0 %v825
        %955 = vmatprep.subr.bf16.mxu0 0
        %956 = vmatpush1.bf16.msra.mxu0 %v826
        %957 = vmatprep.subr.bf16.mxu0 0
        %958 = vmatpush1.bf16.msra.mxu0 %v827
        %959 = vmatprep.subr.bf16.mxu0 0
        %960 = vmatpush1.bf16.msra.mxu0 %v828
        %961 = vmatprep.subr.bf16.mxu0 0
        %962 = vmatpush1.bf16.msra.mxu0 %v829
        %963 = vmatprep.subr.bf16.mxu0 0
        %964 = vmatpush1.bf16.msra.mxu0 %v830
        %965 = vmatprep.subr.bf16.mxu0 0
        %966 = vmatpush1.bf16.msra.mxu0 %v831
        %967 = vmatprep.subr.bf16.mxu0 0
        %968 = vmatpush1.bf16.msra.mxu0 %v832
        %969 = vmatprep.subr.bf16.mxu0 0
        %970 = vmatpush1.bf16.msra.mxu0 %v833
        %971 = vmatprep.subr.bf16.mxu0 0
        %972 = vmatpush1.bf16.msra.mxu0 %v834
        %973 = vmatprep.subr.bf16.mxu0 0
        %974 = vmatpush1.bf16.msra.mxu0 %v835
        %975 = vmatprep.mubr.bf16.mxu0 %v464
        %976 = vmatmul.mubr.bf16.gmra.mrb[0].mxu0 %v463
        %v977 = vpop.f32.mrb[0].mxu0
        %v978 = vadd.f32 %v622, %v977
        %v979 = vpop.f32.mrb[0].mxu0
        %v980 = vpop.f32.mrb[0].mxu0
        %v981 = vadd.f32 %v622, %v980
        %v982 = vpop.f32.mrb[0].mxu0
        %983 = vmatprep.mubr.bf16.mxu0 %v471
        %984 = vmatmul.mubr.bf16.gmra.mrb[0].mxu0 %v470
        %v985 = vpop.f32.mrb[0].mxu0
        %v986 = vadd.f32 %v622, %v985
        %v987 = vpop.f32.mrb[0].mxu0
        %v988 = vpop.f32.mrb[0].mxu0
        %v989 = vadd.f32 %v622, %v988
        %v990 = vpop.f32.mrb[0].mxu0
        %991 = vmatprep.mubr.bf16.mxu0 %v478
        %992 = vmatmul.mubr.bf16.gmra.mrb[0].mxu0 %v477
        %v993 = vpop.f32.mrb[0].mxu0
        %v994 = vadd.f32 %v622, %v993
        %v995 = vpop.f32.mrb[0].mxu0
        %v996 = vpop.f32.mrb[0].mxu0
        %v997 = vadd.f32 %v622, %v996
        %v998 = vpop.f32.mrb[0].mxu0
        %999 = vmatprep.mubr.bf16.mxu0 %v485
        %1000 = vmatmul.mubr.bf16.gmra.mrb[0].mxu0 %v484
        %v1001 = vpop.f32.mrb[0].mxu0
        %v1002 = vadd.f32 %v622, %v1001
        %v1003 = vpop.f32.mrb[0].mxu0
        %v1004 = vpop.f32.mrb[0].mxu0
        %v1005 = vadd.f32 %v622, %v1004
        %v1006 = vpop.f32.mrb[0].mxu0
        %1007 = vmatprep.mubr.bf16.mxu0 %v492
        %1008 = vmatmul.mubr.bf16.gmra.mrb[0].mxu0 %v491
        %v1009 = vpop.f32.mrb[0].mxu0
        %v1010 = vadd.f32 %v622, %v1009
        %v1011 = vpop.f32.mrb[0].mxu0
        %v1012 = vpop.f32.mrb[0].mxu0
        %v1013 = vadd.f32 %v622, %v1012
        %v1014 = vpop.f32.mrb[0].mxu0
        %1015 = vmatprep.mubr.bf16.mxu0 %v499
        %1016 = vmatmul.mubr.bf16.gmra.mrb[0].mxu0 %v498
        %v1017 = vpop.f32.mrb[0].mxu0
        %v1018 = vadd.f32 %v622, %v1017
        %v1019 = vpop.f32.mrb[0].mxu0
        %v1020 = vpop.f32.mrb[0].mxu0
        %v1021 = vadd.f32 %v622, %v1020
        %v1022 = vpop.f32.mrb[0].mxu0
        %1023 = vmatprep.mubr.bf16.mxu0 %v506
        %1024 = vmatmul.mubr.bf16.gmra.mrb[0].mxu0 %v505
        %v1025 = vpop.f32.mrb[0].mxu0
        %v1026 = vadd.f32 %v622, %v1025
        %v1027 = vpop.f32.mrb[0].mxu0
        %v1028 = vpop.f32.mrb[0].mxu0
        %v1029 = vadd.f32 %v622, %v1028
        %v1030 = vpop.f32.mrb[0].mxu0
        %1031 = vmatprep.mubr.bf16.mxu0 %v513
        %1032 = vmatmul.mubr.bf16.gmra.mrb[0].mxu0 %v512
        %v1033 = vpop.f32.mrb[0].mxu0
        %v1034 = vadd.f32 %v622, %v1033
        %v1035 = vpop.f32.mrb[0].mxu0
        %v1036 = vpop.f32.mrb[0].mxu0
        %v1037 = vadd.f32 %v622, %v1036
        %v1038 = vpop.f32.mrb[0].mxu0
        %1039 = vdwg.mxu0
        %1040 = vmatprep.subr.bf16.mxu0 0
        %1041 = vmatpush1.bf16.msra.mxu0 %v836
        %1042 = vmatprep.subr.bf16.mxu0 0
        %1043 = vmatpush1.bf16.msra.mxu0 %v837
        %1044 = vmatprep.subr.bf16.mxu0 0
        %1045 = vmatpush1.bf16.msra.mxu0 %v838
        %1046 = vmatprep.subr.bf16.mxu0 0
        %1047 = vmatpush1.bf16.msra.mxu0 %v839
        %1048 = vmatprep.subr.bf16.mxu0 0
        %1049 = vmatpush1.bf16.msra.mxu0 %v840
        %1050 = vmatprep.subr.bf16.mxu0 0
        %1051 = vmatpush1.bf16.msra.mxu0 %v841
        %1052 = vmatprep.subr.bf16.mxu0 0
        %1053 = vmatpush1.bf16.msra.mxu0 %v842
        %1054 = vmatprep.subr.bf16.mxu0 0
        %1055 = vmatpush1.bf16.msra.mxu0 %v843
        %1056 = vmatprep.subr.bf16.mxu0 0
        %1057 = vmatpush1.bf16.msra.mxu0 %v844
        %1058 = vmatprep.subr.bf16.mxu0 0
        %1059 = vmatpush1.bf16.msra.mxu0 %v845
        %1060 = vmatprep.subr.bf16.mxu0 0
        %1061 = vmatpush1.bf16.msra.mxu0 %v846
        %1062 = vmatprep.subr.bf16.mxu0 0
        %1063 = vmatpush1.bf16.msra.mxu0 %v847
        %1064 = vmatprep.subr.bf16.mxu0 0
        %1065 = vmatpush1.bf16.msra.mxu0 %v848
        %1066 = vmatprep.subr.bf16.mxu0 0
        %1067 = vmatpush1.bf16.msra.mxu0 %v849
        %1068 = vmatprep.subr.bf16.mxu0 0
        %1069 = vmatpush1.bf16.msra.mxu0 %v850
        %1070 = vmatprep.subr.bf16.mxu0 0
        %1071 = vmatpush1.bf16.msra.mxu0 %v851
        %1072 = vmatprep.mubr.bf16.mxu0 %v466
        %1073 = vmatmul.mubr.bf16.gmra.mrb[0].mxu0 %v465
        %v1074 = vpop.f32.mrb[0].mxu0
        %v1075 = vadd.f32 %v978, %v1074
        %v1076 = vpop.f32.mrb[0].mxu0
        %v1077 = vpop.f32.mrb[0].mxu0
        %v1078 = vadd.f32 %v981, %v1077
        %v1079 = vpop.f32.mrb[0].mxu0
        %1080 = vmatprep.mubr.bf16.mxu0 %v473
        %1081 = vmatmul.mubr.bf16.gmra.mrb[0].mxu0 %v472
        %v1082 = vpop.f32.mrb[0].mxu0
        %v1083 = vadd.f32 %v986, %v1082
        %v1084 = vpop.f32.mrb[0].mxu0
        %v1085 = vpop.f32.mrb[0].mxu0
        %v1086 = vadd.f32 %v989, %v1085
        %v1087 = vpop.f32.mrb[0].mxu0
        %1088 = vmatprep.mubr.bf16.mxu0 %v480
        %1089 = vmatmul.mubr.bf16.gmra.mrb[0].mxu0 %v479
        %v1090 = vpop.f32.mrb[0].mxu0
        %v1091 = vadd.f32 %v994, %v1090
        %v1092 = vpop.f32.mrb[0].mxu0
        %v1093 = vpop.f32.mrb[0].mxu0
        %v1094 = vadd.f32 %v997, %v1093
        %v1095 = vpop.f32.mrb[0].mxu0
        %1096 = vmatprep.mubr.bf16.mxu0 %v487
        %1097 = vmatmul.mubr.bf16.gmra.mrb[0].mxu0 %v486
        %v1098 = vpop.f32.mrb[0].mxu0
        %v1099 = vadd.f32 %v1002, %v1098
        %v1100 = vpop.f32.mrb[0].mxu0
        %v1101 = vpop.f32.mrb[0].mxu0
        %v1102 = vadd.f32 %v1005, %v1101
        %v1103 = vpop.f32.mrb[0].mxu0
        %1104 = vmatprep.mubr.bf16.mxu0 %v494
        %1105 = vmatmul.mubr.bf16.gmra.mrb[0].mxu0 %v493
        %v1106 = vpop.f32.mrb[0].mxu0
        %v1107 = vadd.f32 %v1010, %v1106
        %v1108 = vpop.f32.mrb[0].mxu0
        %v1109 = vpop.f32.mrb[0].mxu0
        %v1110 = vadd.f32 %v1013, %v1109
        %v1111 = vpop.f32.mrb[0].mxu0
        %1112 = vmatprep.mubr.bf16.mxu0 %v501
        %1113 = vmatmul.mubr.bf16.gmra.mrb[0].mxu0 %v500
        %v1114 = vpop.f32.mrb[0].mxu0
        %v1115 = vadd.f32 %v1018, %v1114
        %v1116 = vpop.f32.mrb[0].mxu0
        %v1117 = vpop.f32.mrb[0].mxu0
        %v1118 = vadd.f32 %v1021, %v1117
        %v1119 = vpop.f32.mrb[0].mxu0
        %1120 = vmatprep.mubr.bf16.mxu0 %v508
        %1121 = vmatmul.mubr.bf16.gmra.mrb[0].mxu0 %v507
        %v1122 = vpop.f32.mrb[0].mxu0
        %v1123 = vadd.f32 %v1026, %v1122
        %v1124 = vpop.f32.mrb[0].mxu0
        %v1125 = vpop.f32.mrb[0].mxu0
        %v1126 = vadd.f32 %v1029, %v1125
        %v1127 = vpop.f32.mrb[0].mxu0
        %1128 = vmatprep.mubr.bf16.mxu0 %v515
        %1129 = vmatmul.mubr.bf16.gmra.mrb[0].mxu0 %v514
        %v1130 = vpop.f32.mrb[0].mxu0
        %v1131 = vadd.f32 %v1034, %v1130
        %v1132 = vpop.f32.mrb[0].mxu0
        %v1133 = vpop.f32.mrb[0].mxu0
        %v1134 = vadd.f32 %v1037, %v1133
        %v1135 = vpop.f32.mrb[0].mxu0
        %1136 = vdwg.mxu0
        %1137 = vmatprep.subr.bf16.mxu0 0
        %1138 = vmatpush1.bf16.msra.mxu0 %v852
        %1139 = vmatprep.subr.bf16.mxu0 0
        %1140 = vmatpush1.bf16.msra.mxu0 %v853
        %1141 = vmatprep.subr.bf16.mxu0 0
        %1142 = vmatpush1.bf16.msra.mxu0 %v854
        %1143 = vmatprep.subr.bf16.mxu0 0
        %1144 = vmatpush1.bf16.msra.mxu0 %v855
        %1145 = vmatprep.subr.bf16.mxu0 0
        %1146 = vmatpush1.bf16.msra.mxu0 %v856
        %1147 = vmatprep.subr.bf16.mxu0 0
        %1148 = vmatpush1.bf16.msra.mxu0 %v857
        %1149 = vmatprep.subr.bf16.mxu0 0
        %1150 = vmatpush1.bf16.msra.mxu0 %v858
        %1151 = vmatprep.subr.bf16.mxu0 0
        %1152 = vmatpush1.bf16.msra.mxu0 %v859
        %1153 = vmatprep.subr.bf16.mxu0 0
        %1154 = vmatpush1.bf16.msra.mxu0 %v860
        %1155 = vmatprep.subr.bf16.mxu0 0
        %1156 = vmatpush1.bf16.msra.mxu0 %v861
        %1157 = vmatprep.subr.bf16.mxu0 0
        %1158 = vmatpush1.bf16.msra.mxu0 %v862
        %1159 = vmatprep.subr.bf16.mxu0 0
        %1160 = vmatpush1.bf16.msra.mxu0 %v863
        %1161 = vmatprep.subr.bf16.mxu0 0
        %1162 = vmatpush1.bf16.msra.mxu0 %v864
        %1163 = vmatprep.subr.bf16.mxu0 0
        %1164 = vmatpush1.bf16.msra.mxu0 %v865
        %1165 = vmatprep.subr.bf16.mxu0 0
        %1166 = vmatpush1.bf16.msra.mxu0 %v866
        %1167 = vmatprep.subr.bf16.mxu0 0
        %1168 = vmatpush1.bf16.msra.mxu0 %v867
        %1169 = vmatprep.mubr.bf16.mxu0 %v468
        %1170 = vmatmul.mubr.bf16.gmra.mrb[0].mxu0 %v467
        %v1171 = vpop.f32.mrb[0].mxu0
        %v1172 = vadd.f32 %v1075, %v1171
        %v1173 = vpop.f32.mrb[0].mxu0
        %v1174 = vpop.f32.mrb[0].mxu0
        %v1175 = vadd.f32 %v1078, %v1174
        %v1176 = vpop.f32.mrb[0].mxu0
        %1177 = vmatprep.mubr.bf16.mxu0 %v475
        %1178 = vmatmul.mubr.bf16.gmra.mrb[0].mxu0 %v474
        %v1179 = vpop.f32.mrb[0].mxu0
        %v1180 = vadd.f32 %v1083, %v1179
        %v1181 = vpop.f32.mrb[0].mxu0
        %v1182 = vpop.f32.mrb[0].mxu0
        %v1183 = vadd.f32 %v1086, %v1182
        %v1184 = vpop.f32.mrb[0].mxu0
        %1185 = vmatprep.mubr.bf16.mxu0 %v482
        %1186 = vmatmul.mubr.bf16.gmra.mrb[0].mxu0 %v481
        %v1187 = vpop.f32.mrb[0].mxu0
        %v1188 = vadd.f32 %v1091, %v1187
        %v1189 = vpop.f32.mrb[0].mxu0
        %v1190 = vpop.f32.mrb[0].mxu0
        %v1191 = vadd.f32 %v1094, %v1190
        %v1192 = vpop.f32.mrb[0].mxu0
        %1193 = vmatprep.mubr.bf16.mxu0 %v489
        %1194 = vmatmul.mubr.bf16.gmra.mrb[0].mxu0 %v488
        %v1195 = vpop.f32.mrb[0].mxu0
        %v1196 = vadd.f32 %v1099, %v1195
        %v1197 = vpop.f32.mrb[0].mxu0
        %v1198 = vpop.f32.mrb[0].mxu0
        %v1199 = vadd.f32 %v1102, %v1198
        %v1200 = vpop.f32.mrb[0].mxu0
        %1201 = vmatprep.mubr.bf16.mxu0 %v496
        %1202 = vmatmul.mubr.bf16.gmra.mrb[0].mxu0 %v495
        %v1203 = vpop.f32.mrb[0].mxu0
        %v1204 = vadd.f32 %v1107, %v1203
        %v1205 = vpop.f32.mrb[0].mxu0
        %v1206 = vpop.f32.mrb[0].mxu0
        %v1207 = vadd.f32 %v1110, %v1206
        %v1208 = vpop.f32.mrb[0].mxu0
        %1209 = vmatprep.mubr.bf16.mxu0 %v503
        %1210 = vmatmul.mubr.bf16.gmra.mrb[0].mxu0 %v502
        %v1211 = vpop.f32.mrb[0].mxu0
        %v1212 = vadd.f32 %v1115, %v1211
        %v1213 = vpop.f32.mrb[0].mxu0
        %v1214 = vpop.f32.mrb[0].mxu0
        %v1215 = vadd.f32 %v1118, %v1214
        %v1216 = vpop.f32.mrb[0].mxu0
        %1217 = vmatprep.mubr.bf16.mxu0 %v510
        %1218 = vmatmul.mubr.bf16.gmra.mrb[0].mxu0 %v509
        %v1219 = vpop.f32.mrb[0].mxu0
        %v1220 = vadd.f32 %v1123, %v1219
        %v1221 = vpop.f32.mrb[0].mxu0
        %v1222 = vpop.f32.mrb[0].mxu0
        %v1223 = vadd.f32 %v1126, %v1222
        %v1224 = vpop.f32.mrb[0].mxu0
        %1225 = vmatprep.mubr.bf16.mxu0 %v517
        %1226 = vmatmul.mubr.bf16.gmra.mrb[0].mxu0 %v516
        %v1227 = vpop.f32.mrb[0].mxu0
        %v1228 = vadd.f32 %v1131, %v1227
        %v1229 = vpop.f32.mrb[0].mxu0
        %v1230 = vpop.f32.mrb[0].mxu0
        %v1231 = vadd.f32 %v1134, %v1230
        %v1232 = vpop.f32.mrb[0].mxu0
        %1233 = vdwg.mxu0
        %1234 = vmatprep.subr.bf16.mxu0 0
        %1235 = vmatpush1.bf16.msra.mxu0 %v868
        %1236 = vmatprep.subr.bf16.mxu0 0
        %1237 = vmatpush1.bf16.msra.mxu0 0
        %1238 = vmatprep.subr.bf16.mxu0 0
        %1239 = vmatpush1.bf16.msra.mxu0 0
        %1240 = vmatprep.subr.bf16.mxu0 0
        %1241 = vmatpush1.bf16.msra.mxu0 0
        %1242 = vmatprep.subr.bf16.mxu0 0
        %1243 = vmatpush1.bf16.msra.mxu0 0
        %1244 = vmatprep.subr.bf16.mxu0 0
        %1245 = vmatpush1.bf16.msra.mxu0 0
        %1246 = vmatprep.subr.bf16.mxu0 0
        %1247 = vmatpush1.bf16.msra.mxu0 0
        %1248 = vmatprep.subr.bf16.mxu0 0
        %1249 = vmatpush1.bf16.msra.mxu0 0
        %1250 = vmatprep.subr.bf16.mxu0 0
        %1251 = vmatpush1.bf16.msra.mxu0 0
        %1252 = vmatprep.subr.bf16.mxu0 0
        %1253 = vmatpush1.bf16.msra.mxu0 0
        %1254 = vmatprep.subr.bf16.mxu0 0
        %1255 = vmatpush1.bf16.msra.mxu0 0
        %1256 = vmatprep.subr.bf16.mxu0 0
        %1257 = vmatpush1.bf16.msra.mxu0 0
        %1258 = vmatprep.subr.bf16.mxu0 0
        %1259 = vmatpush1.bf16.msra.mxu0 0
        %1260 = vmatprep.subr.bf16.mxu0 0
        %1261 = vmatpush1.bf16.msra.mxu0 0
        %1262 = vmatprep.subr.bf16.mxu0 0
        %1263 = vmatpush1.bf16.msra.mxu0 0
        %1264 = vmatprep.subr.bf16.mxu0 0
        %1265 = vmatpush1.bf16.msra.mxu0 0
        %1266 = vmatprep.mubr.bf16.mxu0 0
        %1267 = vmatmul.mubr.bf16.gmra.mrb[0].mxu0 %v920
        %v1268 = vpop.f32.mrb[0].mxu0
        %v1269 = vadd.f32 %v1172, %v1268
        %v1270 = vpop.f32.mrb[0].mxu0
        %v1271 = vpop.f32.mrb[0].mxu0
        %v1272 = vadd.f32 %v1175, %v1271
        %v1273 = vpop.f32.mrb[0].mxu0
        %1274 = vmatprep.mubr.bf16.mxu0 0
        %1275 = vmatmul.mubr.bf16.gmra.mrb[0].mxu0 %v923
        %v1276 = vpop.f32.mrb[0].mxu0
        %v1277 = vadd.f32 %v1180, %v1276
        %v1278 = vpop.f32.mrb[0].mxu0
        %v1279 = vpop.f32.mrb[0].mxu0
        %v1280 = vadd.f32 %v1183, %v1279
        %v1281 = vpop.f32.mrb[0].mxu0
        %1282 = vmatprep.mubr.bf16.mxu0 0
        %1283 = vmatmul.mubr.bf16.gmra.mrb[0].mxu0 %v926
        %v1284 = vpop.f32.mrb[0].mxu0
        %v1285 = vadd.f32 %v1188, %v1284
        %v1286 = vpop.f32.mrb[0].mxu0
        %v1287 = vpop.f32.mrb[0].mxu0
        %v1288 = vadd.f32 %v1191, %v1287
        %v1289 = vpop.f32.mrb[0].mxu0
        %1290 = vmatprep.mubr.bf16.mxu0 0
        %1291 = vmatmul.mubr.bf16.gmra.mrb[0].mxu0 %v929
        %v1292 = vpop.f32.mrb[0].mxu0
        %v1293 = vadd.f32 %v1196, %v1292
        %v1294 = vpop.f32.mrb[0].mxu0
        %v1295 = vpop.f32.mrb[0].mxu0
        %v1296 = vadd.f32 %v1199, %v1295
        %v1297 = vpop.f32.mrb[0].mxu0
        %1298 = vmatprep.mubr.bf16.mxu0 0
        %1299 = vmatmul.mubr.bf16.gmra.mrb[0].mxu0 %v932
        %v1300 = vpop.f32.mrb[0].mxu0
        %v1301 = vadd.f32 %v1204, %v1300
        %v1302 = vpop.f32.mrb[0].mxu0
        %v1303 = vpop.f32.mrb[0].mxu0
        %v1304 = vadd.f32 %v1207, %v1303
        %v1305 = vpop.f32.mrb[0].mxu0
        %1306 = vmatprep.mubr.bf16.mxu0 0
        %1307 = vmatmul.mubr.bf16.gmra.mrb[0].mxu0 %v935
        %v1308 = vpop.f32.mrb[0].mxu0
        %v1309 = vadd.f32 %v1212, %v1308
        %v1310 = vpop.f32.mrb[0].mxu0
        %v1311 = vpop.f32.mrb[0].mxu0
        %v1312 = vadd.f32 %v1215, %v1311
        %v1313 = vpop.f32.mrb[0].mxu0
        %1314 = vmatprep.mubr.bf16.mxu0 0
        %1315 = vmatmul.mubr.bf16.gmra.mrb[0].mxu0 %v938
        %v1316 = vpop.f32.mrb[0].mxu0
        %v1317 = vadd.f32 %v1220, %v1316
        %v1318 = vpop.f32.mrb[0].mxu0
        %v1319 = vpop.f32.mrb[0].mxu0
        %v1320 = vadd.f32 %v1223, %v1319
        %v1321 = vpop.f32.mrb[0].mxu0
        %1322 = vmatprep.mubr.bf16.mxu0 0
        %1323 = vmatmul.mubr.bf16.gmra.mrb[0].mxu0 %v941
        %v1324 = vpop.f32.mrb[0].mxu0
        %v1325 = vadd.f32 %v1228, %v1324
        %v1326 = vpop.f32.mrb[0].mxu0
        %v1327 = vpop.f32.mrb[0].mxu0
        %v1328 = vadd.f32 %v1231, %v1327
        %v1329 = vpop.f32.mrb[0].mxu0
        %1330 = vdwg.mxu0
        %v1331 = vxor.u32 %v1269, 2147483648
        %v1332 = vxor.u32 %v1272, 2147483648
        %v1333 = vxor.u32 %v1277, 2147483648
        %v1334 = vxor.u32 %v1280, 2147483648
        %v1335 = vxor.u32 %v1285, 2147483648
        %v1336 = vxor.u32 %v1288, 2147483648
        %v1337 = vxor.u32 %v1293, 2147483648
        %v1338 = vxor.u32 %v1296, 2147483648
        %v1339 = vxor.u32 %v1301, 2147483648
        %v1340 = vxor.u32 %v1304, 2147483648
        %v1341 = vxor.u32 %v1309, 2147483648
        %v1342 = vxor.u32 %v1312, 2147483648
        %v1343 = vxor.u32 %v1317, 2147483648
        %v1344 = vxor.u32 %v1320, 2147483648
        %v1345 = vxor.u32 %v1325, 2147483648
        %v1346 = vxor.u32 %v1328, 2147483648
        %v1347 = vmul.f32 %v1331, 1.442695
        %v1348 = vpow.pop %v1347
        %v1349 = vmul.f32 %v1332, 1.442695
        %v1350 = vpow.pop %v1349
        %v1351 = vmul.f32 %v1333, 1.442695
        %v1352 = vpow.pop %v1351
        %v1353 = vmul.f32 %v1334, 1.442695
        %v1354 = vpow.pop %v1353
        %v1355 = vmul.f32 %v1335, 1.442695
        %v1356 = vpow.pop %v1355
        %v1357 = vmul.f32 %v1336, 1.442695
        %v1358 = vpow.pop %v1357
        %v1359 = vmul.f32 %v1337, 1.442695
        %v1360 = vpow.pop %v1359
        %v1361 = vmul.f32 %v1338, 1.442695
        %v1362 = vpow.pop %v1361
        %v1363 = vmul.f32 %v1339, 1.442695
        %v1364 = vpow.pop %v1363
        %v1365 = vmul.f32 %v1340, 1.442695
        %v1366 = vpow.pop %v1365
        %v1367 = vmul.f32 %v1341, 1.442695
        %v1368 = vpow.pop %v1367
        %v1369 = vmul.f32 %v1342, 1.442695
        %v1370 = vpow.pop %v1369
        %v1371 = vmul.f32 %v1343, 1.442695
        %v1372 = vpow.pop %v1371
        %v1373 = vmul.f32 %v1344, 1.442695
        %v1374 = vpow.pop %v1373
        %v1375 = vmul.f32 %v1345, 1.442695
        %v1376 = vpow.pop %v1375
        %v1377 = vmul.f32 %v1346, 1.442695
        %v1378 = vpow.pop %v1377
        %v1379 = vadd.f32 %v1348, 1.0
        %v1380 = vadd.f32 %v1350, 1.0
        %v1381 = vadd.f32 %v1352, 1.0
        %v1382 = vadd.f32 %v1354, 1.0
        %v1383 = vadd.f32 %v1356, 1.0
        %v1384 = vadd.f32 %v1358, 1.0
        %v1385 = vadd.f32 %v1360, 1.0
        %v1386 = vadd.f32 %v1362, 1.0
        %v1387 = vadd.f32 %v1364, 1.0
        %v1388 = vadd.f32 %v1366, 1.0
        %v1389 = vadd.f32 %v1368, 1.0
        %v1390 = vadd.f32 %v1370, 1.0
        %v1391 = vadd.f32 %v1372, 1.0
        %v1392 = vadd.f32 %v1374, 1.0
        %v1393 = vadd.f32 %v1376, 1.0
        %v1394 = vadd.f32 %v1378, 1.0
        %v1395 = vrcp.pop %v1379
        %v1396 = vmul.f32 1.0, %v1395
        %v1397 = vrcp.pop %v1380
        %v1398 = vmul.f32 1.0, %v1397
        %v1399 = vrcp.pop %v1381
        %v1400 = vmul.f32 1.0, %v1399
        %v1401 = vrcp.pop %v1382
        %v1402 = vmul.f32 1.0, %v1401
        %v1403 = vrcp.pop %v1383
        %v1404 = vmul.f32 1.0, %v1403
        %v1405 = vrcp.pop %v1384
        %v1406 = vmul.f32 1.0, %v1405
        %v1407 = vrcp.pop %v1385
        %v1408 = vmul.f32 1.0, %v1407
        %v1409 = vrcp.pop %v1386
        %v1410 = vmul.f32 1.0, %v1409
        %v1411 = vrcp.pop %v1387
        %v1412 = vmul.f32 1.0, %v1411
        %v1413 = vrcp.pop %v1388
        %v1414 = vmul.f32 1.0, %v1413
        %v1415 = vrcp.pop %v1389
        %v1416 = vmul.f32 1.0, %v1415
        %v1417 = vrcp.pop %v1390
        %v1418 = vmul.f32 1.0, %v1417
        %v1419 = vrcp.pop %v1391
        %v1420 = vmul.f32 1.0, %v1419
        %v1421 = vrcp.pop %v1392
        %v1422 = vmul.f32 1.0, %v1421
        %v1423 = vrcp.pop %v1393
        %v1424 = vmul.f32 1.0, %v1423
        %v1425 = vrcp.pop %v1394
        %v1426 = vmul.f32 1.0, %v1425
        %v1427 = vpack.c.bf16 %v1398, %v1396
        %v1428 = vpack.c.bf16 %v1402, %v1400
        %v1429 = vpack.c.bf16 %v1406, %v1404
        %v1430 = vpack.c.bf16 %v1410, %v1408
        %v1431 = vpack.c.bf16 %v1414, %v1412
        %v1432 = vpack.c.bf16 %v1418, %v1416
        %v1433 = vpack.c.bf16 %v1422, %v1420
        %v1434 = vpack.c.bf16 %v1426, %v1424
        %v1435 = vld [vmem:[%s3] sm:$0xf]
        %v1436 = vld [vmem:[%s3 + $0x4] sm:$0xf]
        %v1437 = vld [vmem:[%s3 + $0x8] sm:$0xf]
        %v1438 = vld [vmem:[%s3 + $0xc] sm:$0xf]
        %v1439 = vld [vmem:[%s3 + $0x10] sm:$0xf]
        %v1440 = vld [vmem:[%s3 + $0x14] sm:$0xf]
        %v1441 = vld [vmem:[%s3 + $0x18] sm:$0x1]
        %v1442 = vld [vmem:[#allocation6] sm:$0x1]
        %v1444 = vlaneseq
        %v1445 = vshrl.u32 %v1444, 7
        %v1446 = vsub.s32 0, %v1445
        %v1447 = vrot.slane %v1442, %v1446
        %v1456 = vunpack.c.l.b16 %v1435
        %v1457 = vunpack.c.l.b16 %v1436
        %v1458 = vunpack.c.l.b16 %v1437
        %v1459 = vunpack.c.l.b16 %v1438
        %v1460 = vunpack.c.l.b16 %v1439
        %v1461 = vunpack.c.l.b16 %v1440
        %v1462 = vunpack.c.l.b16 %v1441
        %v1463 = vpack.c.b16 %v1457, %v1456
        %v1464 = vpack.c.b16 %v1459, %v1458
        %v1465 = vpack.c.b16 %v1461, %v1460
        %v1466 = vpack.c.b16 %v1462, %v1462
        %vm1470 = vcmask 408576
        %v1472 = vsel %vm1470, %v1427, 0
        %v1475 = vsel %vm1470, %v1428, 0
        %v1478 = vsel %vm1470, %v1429, 0
        %v1481 = vsel %vm1470, %v1430, 0
        %v1484 = vsel %vm1470, %v1431, 0
        %v1487 = vsel %vm1470, %v1432, 0
        %v1490 = vsel %vm1470, %v1433, 0
        %v1493 = vsel %vm1470, %v1434, 0
        %vm1495 = vcmask 1040384
        %v1497 = vsel %vm1495, %v1466, 0
        %1499 = vmatprep.subr.bf16.mxu0 0
        %1500 = vmatpush1.bf16.msra.mxu0 %v1463
        %1501 = vmatprep.subr.bf16.mxu0 0
        %1502 = vmatpush1.bf16.msra.mxu0 %v1464
        %1503 = vmatprep.subr.bf16.mxu0 0
        %1504 = vmatpush1.bf16.msra.mxu0 %v1465
        %1505 = vmatprep.subr.bf16.mxu0 0
        %1506 = vmatpush1.bf16.msra.mxu0 %v1497
        %1507 = vmatprep.subr.bf16.mxu0 0
        %1508 = vmatpush1.bf16.msra.mxu0 0
        %1509 = vmatprep.subr.bf16.mxu0 0
        %1510 = vmatpush1.bf16.msra.mxu0 0
        %1511 = vmatprep.subr.bf16.mxu0 0
        %1512 = vmatpush1.bf16.msra.mxu0 0
        %1513 = vmatprep.subr.bf16.mxu0 0
        %1514 = vmatpush1.bf16.msra.mxu0 0
        %1515 = vmatprep.subr.bf16.mxu0 0
        %1516 = vmatpush1.bf16.msra.mxu0 0
        %1517 = vmatprep.subr.bf16.mxu0 0
        %1518 = vmatpush1.bf16.msra.mxu0 0
        %1519 = vmatprep.subr.bf16.mxu0 0
        %1520 = vmatpush1.bf16.msra.mxu0 0
        %1521 = vmatprep.subr.bf16.mxu0 0
        %1522 = vmatpush1.bf16.msra.mxu0 0
        %1523 = vmatprep.subr.bf16.mxu0 0
        %1524 = vmatpush1.bf16.msra.mxu0 0
        %1525 = vmatprep.subr.bf16.mxu0 0
        %1526 = vmatpush1.bf16.msra.mxu0 0
        %1527 = vmatprep.subr.bf16.mxu0 0
        %1528 = vmatpush1.bf16.msra.mxu0 0
        %1529 = vmatprep.subr.bf16.mxu0 0
        %1530 = vmatpush1.bf16.msra.mxu0 0
        %1531 = vmatprep.mubr.bf16.mxu0 0
        %1532 = vmatmul.mubr.bf16.gmra.mrb[0].mxu0 %v1472
        %v1533 = vpop.f32.mrb[0].mxu0
        %v1534 = vadd.f32 %v1447, %v1533
        %v1535 = vpop.f32.mrb[0].mxu0
        %v1536 = vpop.f32.mrb[0].mxu0
        %v1537 = vadd.f32 %v1447, %v1536
        %v1538 = vpop.f32.mrb[0].mxu0
        %1539 = vmatprep.mubr.bf16.mxu0 0
        %1540 = vmatmul.mubr.bf16.gmra.mrb[0].mxu0 %v1475
        %v1541 = vpop.f32.mrb[0].mxu0
        %v1542 = vadd.f32 %v1447, %v1541
        %v1543 = vpop.f32.mrb[0].mxu0
        %v1544 = vpop.f32.mrb[0].mxu0
        %v1545 = vadd.f32 %v1447, %v1544
        %v1546 = vpop.f32.mrb[0].mxu0
        %1547 = vmatprep.mubr.bf16.mxu0 0
        %1548 = vmatmul.mubr.bf16.gmra.mrb[0].mxu0 %v1478
        %v1549 = vpop.f32.mrb[0].mxu0
        %v1550 = vadd.f32 %v1447, %v1549
        %v1551 = vpop.f32.mrb[0].mxu0
        %v1552 = vpop.f32.mrb[0].mxu0
        %v1553 = vadd.f32 %v1447, %v1552
        %v1554 = vpop.f32.mrb[0].mxu0
        %1555 = vmatprep.mubr.bf16.mxu0 0
        %1556 = vmatmul.mubr.bf16.gmra.mrb[0].mxu0 %v1481
        %v1557 = vpop.f32.mrb[0].mxu0
        %v1558 = vadd.f32 %v1447, %v1557
        %v1559 = vpop.f32.mrb[0].mxu0
        %v1560 = vpop.f32.mrb[0].mxu0
        %v1561 = vadd.f32 %v1447, %v1560
        %v1562 = vpop.f32.mrb[0].mxu0
        %1563 = vmatprep.mubr.bf16.mxu0 0
        %1564 = vmatmul.mubr.bf16.gmra.mrb[0].mxu0 %v1484
        %v1565 = vpop.f32.mrb[0].mxu0
        %v1566 = vadd.f32 %v1447, %v1565
        %v1567 = vpop.f32.mrb[0].mxu0
        %v1568 = vpop.f32.mrb[0].mxu0
        %v1569 = vadd.f32 %v1447, %v1568
        %v1570 = vpop.f32.mrb[0].mxu0
        %1571 = vmatprep.mubr.bf16.mxu0 0
        %1572 = vmatmul.mubr.bf16.gmra.mrb[0].mxu0 %v1487
        %v1573 = vpop.f32.mrb[0].mxu0
        %v1574 = vadd.f32 %v1447, %v1573
        %v1575 = vpop.f32.mrb[0].mxu0
        %v1576 = vpop.f32.mrb[0].mxu0
        %v1577 = vadd.f32 %v1447, %v1576
        %v1578 = vpop.f32.mrb[0].mxu0
        %1579 = vmatprep.mubr.bf16.mxu0 0
        %1580 = vmatmul.mubr.bf16.gmra.mrb[0].mxu0 %v1490
        %v1581 = vpop.f32.mrb[0].mxu0
        %v1582 = vadd.f32 %v1447, %v1581
        %v1583 = vpop.f32.mrb[0].mxu0
        %v1584 = vpop.f32.mrb[0].mxu0
        %v1585 = vadd.f32 %v1447, %v1584
        %v1586 = vpop.f32.mrb[0].mxu0
        %1587 = vmatprep.mubr.bf16.mxu0 0
        %1588 = vmatmul.mubr.bf16.gmra.mrb[0].mxu0 %v1493
        %v1589 = vpop.f32.mrb[0].mxu0
        %v1590 = vadd.f32 %v1447, %v1589
        %v1591 = vpop.f32.mrb[0].mxu0
        %v1592 = vpop.f32.mrb[0].mxu0
        %v1593 = vadd.f32 %v1447, %v1592
        %v1594 = vpop.f32.mrb[0].mxu0
        %1595 = vdwg.mxu0
        %v1596 = vxor.u32 %v1534, 2147483648
        %v1597 = vxor.u32 %v1537, 2147483648
        %v1598 = vxor.u32 %v1542, 2147483648
        %v1599 = vxor.u32 %v1545, 2147483648
        %v1600 = vxor.u32 %v1550, 2147483648
        %v1601 = vxor.u32 %v1553, 2147483648
        %v1602 = vxor.u32 %v1558, 2147483648
        %v1603 = vxor.u32 %v1561, 2147483648
        %v1604 = vxor.u32 %v1566, 2147483648
        %v1605 = vxor.u32 %v1569, 2147483648
        %v1606 = vxor.u32 %v1574, 2147483648
        %v1607 = vxor.u32 %v1577, 2147483648
        %v1608 = vxor.u32 %v1582, 2147483648
        %v1609 = vxor.u32 %v1585, 2147483648
        %v1610 = vxor.u32 %v1590, 2147483648
        %v1611 = vxor.u32 %v1593, 2147483648
        %v1612 = vmul.f32 %v1596, 1.442695
        %v1613 = vpow.pop %v1612
        %v1614 = vmul.f32 %v1597, 1.442695
        %v1615 = vpow.pop %v1614
        %v1616 = vmul.f32 %v1598, 1.442695
        %v1617 = vpow.pop %v1616
        %v1618 = vmul.f32 %v1599, 1.442695
        %v1619 = vpow.pop %v1618
        %v1620 = vmul.f32 %v1600, 1.442695
        %v1621 = vpow.pop %v1620
        %v1622 = vmul.f32 %v1601, 1.442695
        %v1623 = vpow.pop %v1622
        %v1624 = vmul.f32 %v1602, 1.442695
        %v1625 = vpow.pop %v1624
        %v1626 = vmul.f32 %v1603, 1.442695
        %v1627 = vpow.pop %v1626
        %v1628 = vmul.f32 %v1604, 1.442695
        %v1629 = vpow.pop %v1628
        %v1630 = vmul.f32 %v1605, 1.442695
        %v1631 = vpow.pop %v1630
        %v1632 = vmul.f32 %v1606, 1.442695
        %v1633 = vpow.pop %v1632
        %v1634 = vmul.f32 %v1607, 1.442695
        %v1635 = vpow.pop %v1634
        %v1636 = vmul.f32 %v1608, 1.442695
        %v1637 = vpow.pop %v1636
        %v1638 = vmul.f32 %v1609, 1.442695
        %v1639 = vpow.pop %v1638
        %v1640 = vmul.f32 %v1610, 1.442695
        %v1641 = vpow.pop %v1640
        %v1642 = vmul.f32 %v1611, 1.442695
        %v1643 = vpow.pop %v1642
        %v1644 = vadd.f32 %v1613, 1.0
        %v1645 = vadd.f32 %v1615, 1.0
        %v1646 = vadd.f32 %v1617, 1.0
        %v1647 = vadd.f32 %v1619, 1.0
        %v1648 = vadd.f32 %v1621, 1.0
        %v1649 = vadd.f32 %v1623, 1.0
        %v1650 = vadd.f32 %v1625, 1.0
        %v1651 = vadd.f32 %v1627, 1.0
        %v1652 = vadd.f32 %v1629, 1.0
        %v1653 = vadd.f32 %v1631, 1.0
        %v1654 = vadd.f32 %v1633, 1.0
        %v1655 = vadd.f32 %v1635, 1.0
        %v1656 = vadd.f32 %v1637, 1.0
        %v1657 = vadd.f32 %v1639, 1.0
        %v1658 = vadd.f32 %v1641, 1.0
        %v1659 = vadd.f32 %v1643, 1.0
        %v1660 = vrcp.pop %v1644
        %v1661 = vmul.f32 1.0, %v1660
        %v1662 = vrcp.pop %v1645
        %v1663 = vmul.f32 1.0, %v1662
        %v1664 = vrcp.pop %v1646
        %v1665 = vmul.f32 1.0, %v1664
        %v1666 = vrcp.pop %v1647
        %v1667 = vmul.f32 1.0, %v1666
        %v1668 = vrcp.pop %v1648
        %v1669 = vmul.f32 1.0, %v1668
        %v1670 = vrcp.pop %v1649
        %v1671 = vmul.f32 1.0, %v1670
        %v1672 = vrcp.pop %v1650
        %v1673 = vmul.f32 1.0, %v1672
        %v1674 = vrcp.pop %v1651
        %v1675 = vmul.f32 1.0, %v1674
        %v1676 = vrcp.pop %v1652
        %v1677 = vmul.f32 1.0, %v1676
        %v1678 = vrcp.pop %v1653
        %v1679 = vmul.f32 1.0, %v1678
        %v1680 = vrcp.pop %v1654
        %v1681 = vmul.f32 1.0, %v1680
        %v1682 = vrcp.pop %v1655
        %v1683 = vmul.f32 1.0, %v1682
        %v1684 = vrcp.pop %v1656
        %v1685 = vmul.f32 1.0, %v1684
        %v1686 = vrcp.pop %v1657
        %v1687 = vmul.f32 1.0, %v1686
        %v1688 = vrcp.pop %v1658
        %v1689 = vmul.f32 1.0, %v1688
        %v1690 = vrcp.pop %v1659
        %v1691 = vmul.f32 1.0, %v1690
        %v1692 = vpack.c.bf16 %v1663, %v1661
        %v1693 = vpack.c.bf16 %v1667, %v1665
        %v1694 = vpack.c.bf16 %v1671, %v1669
        %v1695 = vpack.c.bf16 %v1675, %v1673
        %v1696 = vpack.c.bf16 %v1679, %v1677
        %v1697 = vpack.c.bf16 %v1683, %v1681
        %v1698 = vpack.c.bf16 %v1687, %v1685
        %v1699 = vpack.c.bf16 %v1691, %v1689
        %v1700 = vld [vmem:[%s5] sm:$0xf]
        %v1701 = vld [vmem:[%s5 + $0x4] sm:$0xf]
        %v1702 = vld [vmem:[%s5 + $0x8] sm:$0x3]
        %v1703 = vld [vmem:[#allocation7] sm:$0x1]
        %v1705 = vlaneseq
        %v1706 = vshrl.u32 %v1705, 7
        %v1707 = vsub.s32 0, %v1706
        %v1708 = vrot.slane %v1703, %v1707
        %v1713 = vunpack.c.l.b16 %v1700
        %v1714 = vunpack.c.l.b16 %v1701
        %v1715 = vunpack.c.l.b16 %v1702
        %v1716 = vpack.c.b16 %v1714, %v1713
        %v1717 = vpack.c.b16 %v1715, %v1715
        %vm1719 = vcmask 162816
        %v1721 = vsel %vm1719, %v1692, 0
        %v1724 = vsel %vm1719, %v1693, 0
        %v1727 = vsel %vm1719, %v1694, 0
        %v1730 = vsel %vm1719, %v1695, 0
        %v1733 = vsel %vm1719, %v1696, 0
        %v1736 = vsel %vm1719, %v1697, 0
        %v1739 = vsel %vm1719, %v1698, 0
        %v1742 = vsel %vm1719, %v1699, 0
        %vm1744 = vcmask 1041408
        %v1746 = vsel %vm1744, %v1717, 0
        %1748 = vmatprep.subr.bf16.mxu0 0
        %1749 = vmatpush1.bf16.msra.mxu0 %v1716
        %1750 = vmatprep.subr.bf16.mxu0 0
        %1751 = vmatpush1.bf16.msra.mxu0 %v1746
        %1752 = vmatprep.subr.bf16.mxu0 0
        %1753 = vmatpush1.bf16.msra.mxu0 0
        %1754 = vmatprep.subr.bf16.mxu0 0
        %1755 = vmatpush1.bf16.msra.mxu0 0
        %1756 = vmatprep.subr.bf16.mxu0 0
        %1757 = vmatpush1.bf16.msra.mxu0 0
        %1758 = vmatprep.subr.bf16.mxu0 0
        %1759 = vmatpush1.bf16.msra.mxu0 0
        %1760 = vmatprep.subr.bf16.mxu0 0
        %1761 = vmatpush1.bf16.msra.mxu0 0
        %1762 = vmatprep.subr.bf16.mxu0 0
        %1763 = vmatpush1.bf16.msra.mxu0 0
        %1764 = vmatprep.subr.bf16.mxu0 0
        %1765 = vmatpush1.bf16.msra.mxu0 0
        %1766 = vmatprep.subr.bf16.mxu0 0
        %1767 = vmatpush1.bf16.msra.mxu0 0
        %1768 = vmatprep.subr.bf16.mxu0 0
        %1769 = vmatpush1.bf16.msra.mxu0 0
        %1770 = vmatprep.subr.bf16.mxu0 0
        %1771 = vmatpush1.bf16.msra.mxu0 0
        %1772 = vmatprep.subr.bf16.mxu0 0
        %1773 = vmatpush1.bf16.msra.mxu0 0
        %1774 = vmatprep.subr.bf16.mxu0 0
        %1775 = vmatpush1.bf16.msra.mxu0 0
        %1776 = vmatprep.subr.bf16.mxu0 0
        %1777 = vmatpush1.bf16.msra.mxu0 0
        %1778 = vmatprep.subr.bf16.mxu0 0
        %1779 = vmatpush1.bf16.msra.mxu0 0
        %1780 = vmatprep.mubr.bf16.mxu0 0
        %1781 = vmatmul.mubr.bf16.gmra.mrb[0].mxu0 %v1721
        %v1782 = vpop.f32.mrb[0].mxu0
        %v1783 = vadd.f32 %v1708, %v1782
        %v1784 = vpop.f32.mrb[0].mxu0
        %v1785 = vpop.f32.mrb[0].mxu0
        %v1786 = vadd.f32 %v1708, %v1785
        %v1787 = vpop.f32.mrb[0].mxu0
        %1788 = vmatprep.mubr.bf16.mxu0 0
        %1789 = vmatmul.mubr.bf16.gmra.mrb[0].mxu0 %v1724
        %v1790 = vpop.f32.mrb[0].mxu0
        %v1791 = vadd.f32 %v1708, %v1790
        %v1792 = vpop.f32.mrb[0].mxu0
        %v1793 = vpop.f32.mrb[0].mxu0
        %v1794 = vadd.f32 %v1708, %v1793
        %v1795 = vpop.f32.mrb[0].mxu0
        %1796 = vmatprep.mubr.bf16.mxu0 0
        %1797 = vmatmul.mubr.bf16.gmra.mrb[0].mxu0 %v1727
        %v1798 = vpop.f32.mrb[0].mxu0
        %v1799 = vadd.f32 %v1708, %v1798
        %v1800 = vpop.f32.mrb[0].mxu0
        %v1801 = vpop.f32.mrb[0].mxu0
        %v1802 = vadd.f32 %v1708, %v1801
        %v1803 = vpop.f32.mrb[0].mxu0
        %1804 = vmatprep.mubr.bf16.mxu0 0
        %1805 = vmatmul.mubr.bf16.gmra.mrb[0].mxu0 %v1730
        %v1806 = vpop.f32.mrb[0].mxu0
        %v1807 = vadd.f32 %v1708, %v1806
        %v1808 = vpop.f32.mrb[0].mxu0
        %v1809 = vpop.f32.mrb[0].mxu0
        %v1810 = vadd.f32 %v1708, %v1809
        %v1811 = vpop.f32.mrb[0].mxu0
        %1812 = vmatprep.mubr.bf16.mxu0 0
        %1813 = vmatmul.mubr.bf16.gmra.mrb[0].mxu0 %v1733
        %v1814 = vpop.f32.mrb[0].mxu0
        %v1815 = vadd.f32 %v1708, %v1814
        %v1816 = vpop.f32.mrb[0].mxu0
        %v1817 = vpop.f32.mrb[0].mxu0
        %v1818 = vadd.f32 %v1708, %v1817
        %v1819 = vpop.f32.mrb[0].mxu0
        %1820 = vmatprep.mubr.bf16.mxu0 0
        %1821 = vmatmul.mubr.bf16.gmra.mrb[0].mxu0 %v1736
        %v1822 = vpop.f32.mrb[0].mxu0
        %v1823 = vadd.f32 %v1708, %v1822
        %v1824 = vpop.f32.mrb[0].mxu0
        %v1825 = vpop.f32.mrb[0].mxu0
        %v1826 = vadd.f32 %v1708, %v1825
        %v1827 = vpop.f32.mrb[0].mxu0
        %1828 = vmatprep.mubr.bf16.mxu0 0
        %1829 = vmatmul.mubr.bf16.gmra.mrb[0].mxu0 %v1739
        %v1830 = vpop.f32.mrb[0].mxu0
        %v1831 = vadd.f32 %v1708, %v1830
        %v1832 = vpop.f32.mrb[0].mxu0
        %v1833 = vpop.f32.mrb[0].mxu0
        %v1834 = vadd.f32 %v1708, %v1833
        %v1835 = vpop.f32.mrb[0].mxu0
        %1836 = vmatprep.mubr.bf16.mxu0 0
        %1837 = vmatmul.mubr.bf16.gmra.mrb[0].mxu0 %v1742
        %v1838 = vpop.f32.mrb[0].mxu0
        %v1839 = vadd.f32 %v1708, %v1838
        %v1840 = vpop.f32.mrb[0].mxu0
        %v1841 = vpop.f32.mrb[0].mxu0
        %v1842 = vadd.f32 %v1708, %v1841
        %v1843 = vpop.f32.mrb[0].mxu0
        %1844 = vdwg.mxu0
        %vm1845 = vcmask 80896
        %v1846 = vsel %vm1845, %v1783, -inf
        %1847 = vmax.xlane.f32.xlu0 %v1846
        %v1848 = vpop.xlane.xlu0 %1847
        %v1849 = vsel %vm1845, %v1786, -inf
        %1850 = vmax.xlane.f32.xlu0 %v1849
        %v1851 = vpop.xlane.xlu0 %1850
        %v1852 = vsel %vm1845, %v1791, -inf
        %1853 = vmax.xlane.f32.xlu0 %v1852
        %v1854 = vpop.xlane.xlu0 %1853
        %v1855 = vsel %vm1845, %v1794, -inf
        %1856 = vmax.xlane.f32.xlu0 %v1855
        %v1857 = vpop.xlane.xlu0 %1856
        %v1858 = vsel %vm1845, %v1799, -inf
        %1859 = vmax.xlane.f32.xlu0 %v1858
        %v1860 = vpop.xlane.xlu0 %1859
        %v1861 = vsel %vm1845, %v1802, -inf
        %1862 = vmax.xlane.f32.xlu0 %v1861
        %v1863 = vpop.xlane.xlu0 %1862
        %v1864 = vsel %vm1845, %v1807, -inf
        %1865 = vmax.xlane.f32.xlu0 %v1864
        %v1866 = vpop.xlane.xlu0 %1865
        %v1867 = vsel %vm1845, %v1810, -inf
        %1868 = vmax.xlane.f32.xlu0 %v1867
        %v1869 = vpop.xlane.xlu0 %1868
        %v1870 = vsel %vm1845, %v1815, -inf
        %1871 = vmax.xlane.f32.xlu0 %v1870
        %v1872 = vpop.xlane.xlu0 %1871
        %v1873 = vsel %vm1845, %v1818, -inf
        %1874 = vmax.xlane.f32.xlu0 %v1873
        %v1875 = vpop.xlane.xlu0 %1874
        %v1876 = vsel %vm1845, %v1823, -inf
        %1877 = vmax.xlane.f32.xlu0 %v1876
        %v1878 = vpop.xlane.xlu0 %1877
        %v1879 = vsel %vm1845, %v1826, -inf
        %1880 = vmax.xlane.f32.xlu0 %v1879
        %v1881 = vpop.xlane.xlu0 %1880
        %v1882 = vsel %vm1845, %v1831, -inf
        %1883 = vmax.xlane.f32.xlu0 %v1882
        %v1884 = vpop.xlane.xlu0 %1883
        %v1885 = vsel %vm1845, %v1834, -inf
        %1886 = vmax.xlane.f32.xlu0 %v1885
        %v1887 = vpop.xlane.xlu0 %1886
        %v1888 = vsel %vm1845, %v1839, -inf
        %1889 = vmax.xlane.f32.xlu0 %v1888
        %v1890 = vpop.xlane.xlu0 %1889
        %v1891 = vsel %vm1845, %v1842, -inf
        %1892 = vmax.xlane.f32.xlu0 %v1891
        %v1893 = vpop.xlane.xlu0 %1892
        %v1894 = vsub.f32 %v1783, %v1848
        %v1895 = vsub.f32 %v1786, %v1851
        %v1896 = vsub.f32 %v1791, %v1854
        %v1897 = vsub.f32 %v1794, %v1857
        %v1898 = vsub.f32 %v1799, %v1860
        %v1899 = vsub.f32 %v1802, %v1863
        %v1900 = vsub.f32 %v1807, %v1866
        %v1901 = vsub.f32 %v1810, %v1869
        %v1902 = vsub.f32 %v1815, %v1872
        %v1903 = vsub.f32 %v1818, %v1875
        %v1904 = vsub.f32 %v1823, %v1878
        %v1905 = vsub.f32 %v1826, %v1881
        %v1906 = vsub.f32 %v1831, %v1884
        %v1907 = vsub.f32 %v1834, %v1887
        %v1908 = vsub.f32 %v1839, %v1890
        %v1909 = vsub.f32 %v1842, %v1893
        %v1910 = vmul.f32 %v1894, 1.442695
        %v1911 = vpow.pop %v1910
        %v1912 = vmul.f32 %v1895, 1.442695
        %v1913 = vpow.pop %v1912
        %v1914 = vmul.f32 %v1896, 1.442695
        %v1915 = vpow.pop %v1914
        %v1916 = vmul.f32 %v1897, 1.442695
        %v1917 = vpow.pop %v1916
        %v1918 = vmul.f32 %v1898, 1.442695
        %v1919 = vpow.pop %v1918
        %v1920 = vmul.f32 %v1899, 1.442695
        %v1921 = vpow.pop %v1920
        %v1922 = vmul.f32 %v1900, 1.442695
        %v1923 = vpow.pop %v1922
        %v1924 = vmul.f32 %v1901, 1.442695
        %v1925 = vpow.pop %v1924
        %v1926 = vmul.f32 %v1902, 1.442695
        %v1927 = vpow.pop %v1926
        %v1928 = vmul.f32 %v1903, 1.442695
        %v1929 = vpow.pop %v1928
        %v1930 = vmul.f32 %v1904, 1.442695
        %v1931 = vpow.pop %v1930
        %v1932 = vmul.f32 %v1905, 1.442695
        %v1933 = vpow.pop %v1932
        %v1934 = vmul.f32 %v1906, 1.442695
        %v1935 = vpow.pop %v1934
        %v1936 = vmul.f32 %v1907, 1.442695
        %v1937 = vpow.pop %v1936
        %v1938 = vmul.f32 %v1908, 1.442695
        %v1939 = vpow.pop %v1938
        %v1940 = vmul.f32 %v1909, 1.442695
        %v1941 = vpow.pop %v1940
        %v1942 = vsel %vm1845, %v1911, 0.0
        %1943 = vadd.xlane.f32.xlu0 %v1942
        %v1944 = vpop.xlane.xlu0 %1943
        %v1945 = vsel %vm1845, %v1913, 0.0
        %1946 = vadd.xlane.f32.xlu0 %v1945
        %v1947 = vpop.xlane.xlu0 %1946
        %v1948 = vsel %vm1845, %v1915, 0.0
        %1949 = vadd.xlane.f32.xlu0 %v1948
        %v1950 = vpop.xlane.xlu0 %1949
        %v1951 = vsel %vm1845, %v1917, 0.0
        %1952 = vadd.xlane.f32.xlu0 %v1951
        %v1953 = vpop.xlane.xlu0 %1952
        %v1954 = vsel %vm1845, %v1919, 0.0
        %1955 = vadd.xlane.f32.xlu0 %v1954
        %v1956 = vpop.xlane.xlu0 %1955
        %v1957 = vsel %vm1845, %v1921, 0.0
        %1958 = vadd.xlane.f32.xlu0 %v1957
        %v1959 = vpop.xlane.xlu0 %1958
        %v1960 = vsel %vm1845, %v1923, 0.0
        %1961 = vadd.xlane.f32.xlu0 %v1960
        %v1962 = vpop.xlane.xlu0 %1961
        %v1963 = vsel %vm1845, %v1925, 0.0
        %1964 = vadd.xlane.f32.xlu0 %v1963
        %v1965 = vpop.xlane.xlu0 %1964
        %v1966 = vsel %vm1845, %v1927, 0.0
        %1967 = vadd.xlane.f32.xlu0 %v1966
        %v1968 = vpop.xlane.xlu0 %1967
        %v1969 = vsel %vm1845, %v1929, 0.0
        %1970 = vadd.xlane.f32.xlu0 %v1969
        %v1971 = vpop.xlane.xlu0 %1970
        %v1972 = vsel %vm1845, %v1931, 0.0
        %1973 = vadd.xlane.f32.xlu0 %v1972
        %v1974 = vpop.xlane.xlu0 %1973
        %v1975 = vsel %vm1845, %v1933, 0.0
        %1976 = vadd.xlane.f32.xlu0 %v1975
        %v1977 = vpop.xlane.xlu0 %1976
        %v1978 = vsel %vm1845, %v1935, 0.0
        %1979 = vadd.xlane.f32.xlu0 %v1978
        %v1980 = vpop.xlane.xlu0 %1979
        %v1981 = vsel %vm1845, %v1937, 0.0
        %1982 = vadd.xlane.f32.xlu0 %v1981
        %v1983 = vpop.xlane.xlu0 %1982
        %v1984 = vsel %vm1845, %v1939, 0.0
        %1985 = vadd.xlane.f32.xlu0 %v1984
        %v1986 = vpop.xlane.xlu0 %1985
        %v1987 = vsel %vm1845, %v1941, 0.0
        %1988 = vadd.xlane.f32.xlu0 %v1987
        %v1989 = vpop.xlane.xlu0 %1988
        %v1990 = vlog2.pop %v1944
        %v1991 = vmul.f32 %v1990, 0.6931472
        %v1992 = vlog2.pop %v1947
        %v1993 = vmul.f32 %v1992, 0.6931472
        %v1994 = vlog2.pop %v1950
        %v1995 = vmul.f32 %v1994, 0.6931472
        %v1996 = vlog2.pop %v1953
        %v1997 = vmul.f32 %v1996, 0.6931472
        %v1998 = vlog2.pop %v1956
        %v1999 = vmul.f32 %v1998, 0.6931472
        %v2000 = vlog2.pop %v1959
        %v2001 = vmul.f32 %v2000, 0.6931472
        %v2002 = vlog2.pop %v1962
        %v2003 = vmul.f32 %v2002, 0.6931472
        %v2004 = vlog2.pop %v1965
        %v2005 = vmul.f32 %v2004, 0.6931472
        %v2006 = vlog2.pop %v1968
        %v2007 = vmul.f32 %v2006, 0.6931472
        %v2008 = vlog2.pop %v1971
        %v2009 = vmul.f32 %v2008, 0.6931472
        %v2010 = vlog2.pop %v1974
        %v2011 = vmul.f32 %v2010, 0.6931472
        %v2012 = vlog2.pop %v1977
        %v2013 = vmul.f32 %v2012, 0.6931472
        %v2014 = vlog2.pop %v1980
        %v2015 = vmul.f32 %v2014, 0.6931472
        %v2016 = vlog2.pop %v1983
        %v2017 = vmul.f32 %v2016, 0.6931472
        %v2018 = vlog2.pop %v1986
        %v2019 = vmul.f32 %v2018, 0.6931472
        %v2020 = vlog2.pop %v1989
        %v2021 = vmul.f32 %v2020, 0.6931472
        %v2022 = vsub.f32 %v1894, %v1991
        %v2023 = vsub.f32 %v1895, %v1993
        %v2024 = vsub.f32 %v1896, %v1995
        %v2025 = vsub.f32 %v1897, %v1997
        %v2026 = vsub.f32 %v1898, %v1999
        %v2027 = vsub.f32 %v1899, %v2001
        %v2028 = vsub.f32 %v1900, %v2003
        %v2029 = vsub.f32 %v1901, %v2005
        %v2030 = vsub.f32 %v1902, %v2007
        %v2031 = vsub.f32 %v1903, %v2009
        %v2032 = vsub.f32 %v1904, %v2011
        %v2033 = vsub.f32 %v1905, %v2013
        %v2034 = vsub.f32 %v1906, %v2015
        %v2035 = vsub.f32 %v1907, %v2017
        %v2036 = vsub.f32 %v1908, %v2019
        %v2037 = vsub.f32 %v1909, %v2021
        %2038 = vst.msk [vmem:[%s338] sm:$0xff] %vm1845, %v2022
        %2039 = vst.msk [vmem:[%s338 + $0x8] sm:$0xff] %vm1845, %v2023
        %2040 = vst.msk [vmem:[%s338 + $0x10] sm:$0xff] %vm1845, %v2024
        %2041 = vst.msk [vmem:[%s338 + $0x18] sm:$0xff] %vm1845, %v2025
        %2042 = vst.msk [vmem:[%s338 + $0x20] sm:$0xff] %vm1845, %v2026
        %2043 = vst.msk [vmem:[%s338 + $0x28] sm:$0xff] %vm1845, %v2027
        %2044 = vst.msk [vmem:[%s338 + $0x30] sm:$0xff] %vm1845, %v2028
        %2045 = vst.msk [vmem:[%s338 + $0x38] sm:$0xff] %vm1845, %v2029
        %2046 = vst.msk [vmem:[%s338 + $0x40] sm:$0xff] %vm1845, %v2030
        %2047 = vst.msk [vmem:[%s338 + $0x48] sm:$0xff] %vm1845, %v2031
        %2048 = vst.msk [vmem:[%s338 + $0x50] sm:$0xff] %vm1845, %v2032
        %2049 = vst.msk [vmem:[%s338 + $0x58] sm:$0xff] %vm1845, %v2033
        %2050 = vst.msk [vmem:[%s338 + $0x60] sm:$0xff] %vm1845, %v2034
        %2051 = vst.msk [vmem:[%s338 + $0x68] sm:$0xff] %vm1845, %v2035
        %2052 = vst.msk [vmem:[%s338 + $0x70] sm:$0xff] %vm1845, %v2036
        %2053 = vst.msk [vmem:[%s338 + $0x78] sm:$0xff] %vm1845, %v2037
        %s2054 = sand.u32 %s183, 1
        %s2055 = sand.u32 %s183, 1
        %s2056 = smul.addr %s2055, 128
        %s2057 = scalar_lea.vmem [#allocation9], %s2056
        // Predicated region
        $region65: #{tpu_custom_call.1} parent=47 // pred_check
          %p2058 = pneg %p193
        $region66: #{tpu_custom_call.1} parent=47 // pred_check_branch
          %2060 = sbr.rel (%p2058) target = $region68
        $region67: #{tpu_custom_call.1} parent=47 // pred_region
          %s2061 = smul.u32 16, %s23
          %s2062 = ssub.s32 38, %s2061
          %p2063 = scmp.lt.s32.totalorder %s2062, 16
          %s2064 = scalar_select %p2063, %s2062, 16
          %s2065 = smul.u32 128, %s2064
          %p2066 = scmp.ne.s32.totalorder 0, %s2065
          %s2067 = smul.addr %s2061, 8
          %s2068 = scalar_lea.vmem %s7, %s2067
          // Predicated region
          $region69: #{tpu_custom_call.1} parent=67 // pred_check
            %p2069 = pneg %p2066
          $region70: #{tpu_custom_call.1} parent=67 // pred_check_branch
            %2071 = sbr.rel (%p2069) target = $region72
          $region71: #{tpu_custom_call.1} parent=67 // pred_region
            // Predicated region
            $region73: #{tpu_custom_call.1} parent=71 // pred_check
              _
            $region74: #{tpu_custom_call.1} parent=71 // pred_check_branch
              %2073 = sbr.rel (0) target = $region76
            $region75: #{tpu_custom_call.1} parent=71 // pred_region
              // Predicated region
              $region95: #{tpu_custom_call.1} parent=75 // pred_check
                _
              $region96: #{tpu_custom_call.1} parent=75 // pred_check_branch
                %2152 = sbr.rel (0) target = $region98
              $region97: #{tpu_custom_call.1} parent=75 // pred_region
                %s2153 = sshrl.u32 %s2064, 4
                // While loop
                $region99: #{tpu_custom_call.1} parent=97 // loop_pre_header
                  _
                $region100: #{tpu_custom_call.1} parent=97 // loop_header
                  %s2155 = sphi 0, %s2157
                  %p2156 = scmp.ge.s32.totalorder %s2155, %s2153
                  %s2160 = sphi 0, %s2197
                  %s2161 = sphi %s2057, %s2200
                  %s2162 = sphi %s2068, %s2201
                $region101: #{tpu_custom_call.1} parent=97 // loop_header_branch
                  %2159 = sbr.rel (%p2156) target = $region105
                $region102: #{tpu_custom_call.1} parent=97 // loop_body
                  %v2163 = vld [vmem:[%s2161] sm:$0xff]
                  %2164 = vst [vmem:[%s2162] sm:$0xff] %v2163
                  %v2165 = vld [vmem:[%s2161 + $0x8] sm:$0xff]
                  %2166 = vst [vmem:[%s2162 + $0x8] sm:$0xff] %v2165
                  %v2167 = vld [vmem:[%s2161 + $0x10] sm:$0xff]
                  %2168 = vst [vmem:[%s2162 + $0x10] sm:$0xff] %v2167
                  %v2169 = vld [vmem:[%s2161 + $0x18] sm:$0xff]
                  %2170 = vst [vmem:[%s2162 + $0x18] sm:$0xff] %v2169
                  %v2171 = vld [vmem:[%s2161 + $0x20] sm:$0xff]
                  %2172 = vst [vmem:[%s2162 + $0x20] sm:$0xff] %v2171
                  %v2173 = vld [vmem:[%s2161 + $0x28] sm:$0xff]
                  %2174 = vst [vmem:[%s2162 + $0x28] sm:$0xff] %v2173
                  %v2175 = vld [vmem:[%s2161 + $0x30] sm:$0xff]
                  %2176 = vst [vmem:[%s2162 + $0x30] sm:$0xff] %v2175
                  %v2177 = vld [vmem:[%s2161 + $0x38] sm:$0xff]
                  %2178 = vst [vmem:[%s2162 + $0x38] sm:$0xff] %v2177
                  %v2179 = vld [vmem:[%s2161 + $0x40] sm:$0xff]
                  %2180 = vst [vmem:[%s2162 + $0x40] sm:$0xff] %v2179
                  %v2181 = vld [vmem:[%s2161 + $0x48] sm:$0xff]
                  %2182 = vst [vmem:[%s2162 + $0x48] sm:$0xff] %v2181
                  %v2183 = vld [vmem:[%s2161 + $0x50] sm:$0xff]
                  %2184 = vst [vmem:[%s2162 + $0x50] sm:$0xff] %v2183
                  %v2185 = vld [vmem:[%s2161 + $0x58] sm:$0xff]
                  %2186 = vst [vmem:[%s2162 + $0x58] sm:$0xff] %v2185
                  %v2187 = vld [vmem:[%s2161 + $0x60] sm:$0xff]
                  %2188 = vst [vmem:[%s2162 + $0x60] sm:$0xff] %v2187
                  %v2189 = vld [vmem:[%s2161 + $0x68] sm:$0xff]
                  %2190 = vst [vmem:[%s2162 + $0x68] sm:$0xff] %v2189
                  %v2191 = vld [vmem:[%s2161 + $0x70] sm:$0xff]
                  %2192 = vst [vmem:[%s2162 + $0x70] sm:$0xff] %v2191
                  %v2193 = vld [vmem:[%s2161 + $0x78] sm:$0xff]
                  %2194 = vst [vmem:[%s2162 + $0x78] sm:$0xff] %v2193
                  %s2195 = sadd.s32 1, %s2160
                  %p2196 = scmp.ge.s32.totalorder %s2195, %s2153
                  %s2197 = scalar_select %p2196, 0, %s2195
                  %s2198 = smul.u32 %s2197, 128
                  %s2199 = smul.u32 %s2197, 128
                  %s2200 = scalar_lea.vmem %s2057, %s2198 [#allocation9]
                  %s2201 = scalar_lea.vmem %s2068, %s2199
                $region103: #{tpu_custom_call.1} parent=97 // loop_footer
                  %s2157 = sadd.s32 %s2155, 1
                $region104: #{tpu_custom_call.1} parent=97 // loop_footer_branch
                  %2154 = sbr.rel target = $region100
                $region105: #{tpu_custom_call.1} parent=97 // loop_exit
                  _
                %s2202 = sshrl.u32 %s2064, 4
                %s2203 = sand.u32 %s2064, 15
                %s2204 = smul.u32 %s2202, 16
                %s2205 = smul.u32 8, %s2204
                %s2206 = scalar_lea.vmem %s2057, %s2205 [#allocation9]
                %s2207 = smul.u32 8, %s2204
                %s2208 = scalar_lea.vmem %s2068, %s2207
                // While loop
                $region106: #{tpu_custom_call.1} parent=97 // loop_pre_header
                  _
                $region107: #{tpu_custom_call.1} parent=97 // loop_header
                  %s2210 = sphi 0, %s2212
                  %p2211 = scmp.ge.s32.totalorder %s2210, %s2203
                  %s2215 = sphi 0, %s2222
                  %s2216 = sphi %s2206, %s2225
                  %s2217 = sphi %s2208, %s2226
                $region108: #{tpu_custom_call.1} parent=97 // loop_header_branch
                  %2214 = sbr.rel (%p2211) target = $region112
                $region109: #{tpu_custom_call.1} parent=97 // loop_body
                  %v2218 = vld [vmem:[%s2216] sm:$0xff]
                  %2219 = vst [vmem:[%s2217] sm:$0xff] %v2218
                  %s2220 = sadd.s32 1, %s2215
                  %p2221 = scmp.ge.s32.totalorder %s2220, %s2203
                  %s2222 = scalar_select %p2221, 0, %s2220
                  %s2223 = smul.u32 %s2222, 8
                  %s2224 = smul.u32 %s2222, 8
                  %s2225 = scalar_lea.vmem %s2206, %s2223 [#allocation9]
                  %s2226 = scalar_lea.vmem %s2208, %s2224
                $region110: #{tpu_custom_call.1} parent=97 // loop_footer
                  %s2212 = sadd.s32 %s2210, 1
                $region111: #{tpu_custom_call.1} parent=97 // loop_footer_branch
                  %2209 = sbr.rel target = $region107
                $region112: #{tpu_custom_call.1} parent=97 // loop_exit
                  _
              $region98: #{tpu_custom_call.1} parent=75 // pred_fallthru
                _
              // Predicated region
              $region113: #{tpu_custom_call.1} parent=75 // pred_check
                _
              $region114: #{tpu_custom_call.1} parent=75 // pred_check_branch
                %2228 = sbr.rel target = $region116
              $region115: #{tpu_custom_call.1} parent=75 // pred_region
                _
              $region116: #{tpu_custom_call.1} parent=75 // pred_fallthru
                _
            $region76: #{tpu_custom_call.1} parent=71 // pred_fallthru
              _
            // Predicated region
            $region77: #{tpu_custom_call.1} parent=71 // pred_check
              _
            $region78: #{tpu_custom_call.1} parent=71 // pred_check_branch
              %2075 = sbr.rel target = $region80
            $region79: #{tpu_custom_call.1} parent=71 // pred_region
              %s2077 = sshrl.u32 %s2064, 4
              // While loop
              $region81: #{tpu_custom_call.1} parent=79 // loop_pre_header
                _
              $region82: #{tpu_custom_call.1} parent=79 // loop_header
                %s2079 = sphi 0, %s2081
                %p2080 = scmp.ge.s32.totalorder %s2079, %s2077
                %s2084 = sphi 0, %s2121
                %s2085 = sphi %s2057, %s2124
                %s2086 = sphi %s2068, %s2125
              $region83: #{tpu_custom_call.1} parent=79 // loop_header_branch
                %2083 = sbr.rel (%p2080) target = $region87
              $region84: #{tpu_custom_call.1} parent=79 // loop_body
                %v2087 = vld [vmem:[%s2085] sm:$0xff]
                %2088 = vst [vmem:[%s2086] sm:$0xff] %v2087
                %v2089 = vld [vmem:[%s2085 + $0x8] sm:$0xff]
                %2090 = vst [vmem:[%s2086 + $0x8] sm:$0xff] %v2089
                %v2091 = vld [vmem:[%s2085 + $0x10] sm:$0xff]
                %2092 = vst [vmem:[%s2086 + $0x10] sm:$0xff] %v2091
                %v2093 = vld [vmem:[%s2085 + $0x18] sm:$0xff]
                %2094 = vst [vmem:[%s2086 + $0x18] sm:$0xff] %v2093
                %v2095 = vld [vmem:[%s2085 + $0x20] sm:$0xff]
                %2096 = vst [vmem:[%s2086 + $0x20] sm:$0xff] %v2095
                %v2097 = vld [vmem:[%s2085 + $0x28] sm:$0xff]
                %2098 = vst [vmem:[%s2086 + $0x28] sm:$0xff] %v2097
                %v2099 = vld [vmem:[%s2085 + $0x30] sm:$0xff]
                %2100 = vst [vmem:[%s2086 + $0x30] sm:$0xff] %v2099
                %v2101 = vld [vmem:[%s2085 + $0x38] sm:$0xff]
                %2102 = vst [vmem:[%s2086 + $0x38] sm:$0xff] %v2101
                %v2103 = vld [vmem:[%s2085 + $0x40] sm:$0xff]
                %2104 = vst [vmem:[%s2086 + $0x40] sm:$0xff] %v2103
                %v2105 = vld [vmem:[%s2085 + $0x48] sm:$0xff]
                %2106 = vst [vmem:[%s2086 + $0x48] sm:$0xff] %v2105
                %v2107 = vld [vmem:[%s2085 + $0x50] sm:$0xff]
                %2108 = vst [vmem:[%s2086 + $0x50] sm:$0xff] %v2107
                %v2109 = vld [vmem:[%s2085 + $0x58] sm:$0xff]
                %2110 = vst [vmem:[%s2086 + $0x58] sm:$0xff] %v2109
                %v2111 = vld [vmem:[%s2085 + $0x60] sm:$0xff]
                %2112 = vst [vmem:[%s2086 + $0x60] sm:$0xff] %v2111
                %v2113 = vld [vmem:[%s2085 + $0x68] sm:$0xff]
                %2114 = vst [vmem:[%s2086 + $0x68] sm:$0xff] %v2113
                %v2115 = vld [vmem:[%s2085 + $0x70] sm:$0xff]
                %2116 = vst [vmem:[%s2086 + $0x70] sm:$0xff] %v2115
                %v2117 = vld [vmem:[%s2085 + $0x78] sm:$0xff]
                %2118 = vst [vmem:[%s2086 + $0x78] sm:$0xff] %v2117
                %s2119 = sadd.s32 1, %s2084
                %p2120 = scmp.ge.s32.totalorder %s2119, %s2077
                %s2121 = scalar_select %p2120, 0, %s2119
                %s2122 = smul.u32 %s2121, 128
                %s2123 = smul.u32 %s2121, 128
                %s2124 = scalar_lea.vmem %s2057, %s2122 [#allocation9]
                %s2125 = scalar_lea.vmem %s2068, %s2123
              $region85: #{tpu_custom_call.1} parent=79 // loop_footer
                %s2081 = sadd.s32 %s2079, 1
              $region86: #{tpu_custom_call.1} parent=79 // loop_footer_branch
                %2078 = sbr.rel target = $region82
              $region87: #{tpu_custom_call.1} parent=79 // loop_exit
                _
              %s2126 = sshrl.u32 %s2064, 4
              %s2127 = sand.u32 %s2064, 15
              %s2128 = smul.u32 %s2126, 16
              %s2129 = smul.u32 8, %s2128
              %s2130 = scalar_lea.vmem %s2057, %s2129 [#allocation9]
              %s2131 = smul.u32 8, %s2128
              %s2132 = scalar_lea.vmem %s2068, %s2131
              // While loop
              $region88: #{tpu_custom_call.1} parent=79 // loop_pre_header
                _
              $region89: #{tpu_custom_call.1} parent=79 // loop_header
                %s2134 = sphi 0, %s2136
                %p2135 = scmp.ge.s32.totalorder %s2134, %s2127
                %s2139 = sphi 0, %s2146
                %s2140 = sphi %s2130, %s2149
                %s2141 = sphi %s2132, %s2150
              $region90: #{tpu_custom_call.1} parent=79 // loop_header_branch
                %2138 = sbr.rel (%p2135) target = $region94
              $region91: #{tpu_custom_call.1} parent=79 // loop_body
                %v2142 = vld [vmem:[%s2140] sm:$0xff]
                %2143 = vst [vmem:[%s2141] sm:$0xff] %v2142
                %s2144 = sadd.s32 1, %s2139
                %p2145 = scmp.ge.s32.totalorder %s2144, %s2127
                %s2146 = scalar_select %p2145, 0, %s2144
                %s2147 = smul.u32 %s2146, 8
                %s2148 = smul.u32 %s2146, 8
                %s2149 = scalar_lea.vmem %s2130, %s2147 [#allocation9]
                %s2150 = scalar_lea.vmem %s2132, %s2148
              $region92: #{tpu_custom_call.1} parent=79 // loop_footer
                %s2136 = sadd.s32 %s2134, 1
              $region93: #{tpu_custom_call.1} parent=79 // loop_footer_branch
                %2133 = sbr.rel target = $region89
              $region94: #{tpu_custom_call.1} parent=79 // loop_exit
                _
            $region80: #{tpu_custom_call.1} parent=71 // pred_fallthru
              _
          $region72: #{tpu_custom_call.1} parent=67 // pred_fallthru
            _
          %2229 = vnop
        $region68: #{tpu_custom_call.1} parent=47 // pred_fallthru
          _
      $region48: #{tpu_custom_call.1} parent=5 // pred_fallthru
        _
      %p2230 = scmp.le.s32.totalorder 2, %s18
      // Predicated region
      $region117: #{tpu_custom_call.1} parent=5 // pred_check
        %p2231 = pneg %p2230
      $region118: #{tpu_custom_call.1} parent=5 // pred_check_branch
        %2233 = sbr.rel (%p2231) target = $region120
      $region119: #{tpu_custom_call.1} parent=5 // pred_region
        %s2234 = ssub.s32 %s18, 2
        // Predicated region
        $region121: #{tpu_custom_call.1} parent=119 // pred_check
          %p2235 = pneg %p199
        $region122: #{tpu_custom_call.1} parent=119 // pred_check_branch
          %2237 = sbr.rel (%p2235) target = $region124
        $region123: #{tpu_custom_call.1} parent=119 // pred_region
          %s2238 = sand.u32 %s184, 1
          %s2239 = sand.u32 %s184, 1
          %s2240 = smul.addr %s2239, 128
          %s2241 = scalar_lea.vmem [#allocation9], %s2240
        $region124: #{tpu_custom_call.1} parent=119 // pred_fallthru
          _
      $region120: #{tpu_custom_call.1} parent=5 // pred_fallthru
        _
    $region6: #{tpu_custom_call.1} parent=1 // loop_footer
      %s22 = sadd.s32 1, %s18
    $region7: #{tpu_custom_call.1} parent=1 // loop_footer_branch
      %17 = sbr.rel target = $region3
    $region8: #{tpu_custom_call.1} parent=1 // loop_exit
      _
    %2242 = vsyncpa [#allocation3], 1
    %s2243 = scalar_lea.sflag [#allocation3], 1
    %2244 = vsyncpa %s2243, 1
    %2245 = vsyncpa [#allocation5], 1
    %2246 = vsyncpa [#allocation8], 1

</llo_original>
